<compile_context>
chip_gen: v7x
topology: tpu7x:2x2x1
jax: 0.10.0
libtpu: 0.0.40
codegen_flags: <defaults>
</compile_context>

<pallas_src>
import functools
import math

import jax
import jax.numpy as jnp
from jax.experimental import pallas as pl
from jax.experimental.pallas import tpu as pltpu


# ---------------------------------------------------------------------------
# In-kernel building block: one HAN attention level, fully vectorized
# ---------------------------------------------------------------------------
def _attention_level(v, n_groups, group_len, w_ref, b_ref, u_ref, *,
                     approx_recip):
    """One attention level over `n_groups` contiguous groups of `group_len` rows.

    v: (M, D) with M = n_groups * group_len (groups contiguous).
    Returns:
      pooled: (n_groups, D) float32 attention-pooled rows.
      a:      (1, M) float32 lane-dense row of attention weights.
    """
    G, L = n_groups, group_len
    M = G * L
    mm = w_ref.dtype                      # matmul-operand dtype (f32 or bf16)
    vm = v.astype(mm)

    # (1) Projection: ONE big MXU matmul over every row of this level.
    h = jnp.tanh(jnp.dot(vm, w_ref[...], preferred_element_type=jnp.float32)
                 + b_ref[...])                                        # (M, D) f32

    # (2) All scores at once, lane-dense:  s = u . h^T  ->  (1, M).
    s = jax.lax.dot_general(u_ref[...], h.astype(mm),
                            (((1,), (1,)), ((), ())),
                            preferred_element_type=jnp.float32)       # (1, M)

    # (3) Grouped softmax with NO per-group loop.  Softmax is shift-invariant
    #     within each group, so subtracting the row-global max is exactly
    #     equivalent to per-group max subtraction (and numerically stable for
    #     realistically scaled scores).
    e = jnp.exp(s - jnp.max(s, axis=-1, keepdims=True))               # (1, M)

    # Segment-indicator matrices built from 2-D iota (no integer division):
    #   seg  [m, g] = 1 iff row m belongs to group g      (M, G)
    #   seg_t[g, m] = 1 iff row m belongs to group g      (G, M)
    m_ids = jax.lax.broadcasted_iota(jnp.int32, (M, G), 0)
    g_ids = jax.lax.broadcasted_iota(jnp.int32, (M, G), 1)
    seg = ((m_ids >= g_ids * L) & (m_ids < (g_ids + 1) * L)).astype(jnp.float32)
    g_ids_t = jax.lax.broadcasted_iota(jnp.int32, (G, M), 0)
    m_ids_t = jax.lax.broadcasted_iota(jnp.int32, (G, M), 1)
    seg_t = ((m_ids_t >= g_ids_t * L)
             & (m_ids_t < (g_ids_t + 1) * L)).astype(jnp.float32)

    gsum = jnp.dot(e, seg, preferred_element_type=jnp.float32)        # (1, G)
    denom = jnp.dot(gsum, seg_t, preferred_element_type=jnp.float32)  # (1, M)
    a = e * pl.reciprocal(denom, approx=approx_recip)                 # (1, M)

    # (4) Weighted pooling as ONE masked MXU matmul:
    #     A[g, m] = a[m] if row m in group g else 0;  pooled = A @ v.
    amat = (seg_t * a).astype(mm)                                     # (G, M)
    pooled = jnp.dot(amat, vm, preferred_element_type=jnp.float32)    # (G, D)
    return pooled, a


# ---------------------------------------------------------------------------
# Fused kernel: word attn -> sentence attn -> paragraph attn -> fc -> softmax
# One grid step processes BLOCK_B batch elements; intermediates stay in vregs.
# ---------------------------------------------------------------------------
def hier_kernel(x_ref,                                  # (BLOCK_B*P*S*W, D)
                w_w, b_w, u_w,                          # word attention params
                w_s, b_s, u_s,                          # sentence attention params
                w_p, b_p, u_p,                          # paragraph attention params
                fcw_ref, fcb_ref,                       # classifier params
                y_ref, logits_ref,                      # (BLOCK_B, C) each
                wscore_ref, sscore_ref, pscore_ref,     # lane-dense score rows
                *, block_b, P, S, W, approx_recip):
    v0 = x_ref[...]                                     # (BLOCK_B*P*S*W, D)

    # Word level:      groups of W words            -> (BLOCK_B*P*S, D)
    p1, a0 = _attention_level(v0, block_b * P * S, W, w_w, b_w, u_w,
                              approx_recip=approx_recip)
    wscore_ref[...] = a0                                # (1, BLOCK_B*P*S*W)

    # Sentence level:  groups of S sentences        -> (BLOCK_B*P, D)
    p2, a1 = _attention_level(p1, block_b * P, S, w_s, b_s, u_s,
                              approx_recip=approx_recip)
    sscore_ref[...] = a1                                # (1, BLOCK_B*P*S)

    # Paragraph level: groups of P paragraphs       -> (BLOCK_B, D)
    p3, a2 = _attention_level(p2, block_b, P, w_p, b_p, u_p,
                              approx_recip=approx_recip)
    pscore_ref[...] = a2                                # (1, BLOCK_B*P)

    # Classifier + softmax (fused into the same kernel).
    logits = jnp.dot(p3.astype(fcw_ref.dtype), fcw_ref[...],
                     preferred_element_type=jnp.float32) + fcb_ref[...]
    logits_ref[...] = logits                            # (BLOCK_B, C)
    m = jnp.max(logits, axis=-1, keepdims=True)
    e = jnp.exp(logits - m)
    y_ref[...] = e * pl.reciprocal(jnp.sum(e, axis=-1, keepdims=True),
                                   approx=approx_recip)


# ---------------------------------------------------------------------------
# Wrapper
# ---------------------------------------------------------------------------
def _largest_divisor_leq(n, cap):
    cap = max(1, min(cap, n))
    for d in range(cap, 0, -1):
        if n % d == 0:
            return d
    return 1


def hierarchy_model_forward(x, params, *, block_b=None,
                            matmul_dtype=jnp.float32):
    """Fused HAN forward. Returns (y, logits, word_a, sent_a, para_a)."""
    B, P, S, W, D = x.shape
    C = params["fc_w"].shape[1]
    PSW, PS = P * S * W, P * S
    mm = jnp.dtype(matmul_dtype)

    # Per-chip VMEM budget with headroom (v7x: 64 MiB/TC, v5e/v6e: 128 MiB).
    try:
        vmem_cap = int(getattr(pltpu.get_tpu_info(), "vmem_capacity_bytes",
                               64 * 1024 * 1024))
    except Exception:
        vmem_cap = 64 * 1024 * 1024
    vmem_limit = (vmem_cap * 3) // 4        # ~48 MiB on v7x, ~96 MiB on v5e/v6e

    # Batch block: aim for >= 256 projection rows (MXU fill on v6e/v7x) while
    # keeping >= 2 grid steps (megacore / 2-TC sharding) and fitting VMEM.
    if block_b is None:
        want = max(1, -(-256 // PSW))                     # ceil(256 / PSW)
        block_b = _largest_divisor_leq(B, want)
        if B // block_b < 2 and block_b > 1:
            block_b = _largest_divisor_leq(B, block_b // 2)
        # Shrink if the double-buffered x block alone would blow the budget.
        while block_b > 1 and 2 * block_b * PSW * D * mm.itemsize > vmem_limit // 3:
            block_b = _largest_divisor_leq(B, block_b - 1)
    assert B % block_b == 0, (B, block_b)
    nb = B // block_b

    # Wrapper-side reshapes / casts (free in HBM; biases stay float32 so all
    # elementwise math in the kernel runs in f32 even in bf16 mode).
    x3 = x.reshape(nb, block_b * PSW, D).astype(mm)
    w_w, b_w, u_w = params["word"]
    w_s, b_s, u_s = params["sent"]
    w_p, b_p, u_p = params["para"]
    cast = lambda a: a.astype(mm)

    kernel = functools.partial(hier_kernel, block_b=block_b, P=P, S=S, W=W,
                               approx_recip=(mm == jnp.bfloat16))

    # All BlockSpecs below have last-two dims equal to the full array dims.
    # NOTE(review): the constant-index weight blocks could be single-buffered
    # (pipeline_mode=pl.Buffered(1)) to halve their VMEM footprint at large D;
    # at D=128 the saving is noise so we keep the portable default here.
    const = lambda shp: pl.BlockSpec(shp, lambda i: (0, 0))
    in_specs = [
        pl.BlockSpec((None, block_b * PSW, D), lambda i: (i, 0, 0)),  # x rows
        const((D, D)), const((1, D)), const((1, D)),                  # word
        const((D, D)), const((1, D)), const((1, D)),                  # sentence
        const((D, D)), const((1, D)), const((1, D)),                  # paragraph
        const((D, C)), const((1, C)),                                 # fc
    ]
    out_specs = [
        pl.BlockSpec((None, block_b, C), lambda i: (i, 0, 0)),        # y
        pl.BlockSpec((None, block_b, C), lambda i: (i, 0, 0)),        # logits
        pl.BlockSpec((None, 1, block_b * PSW), lambda i: (i, 0, 0)),  # word a
        pl.BlockSpec((None, 1, block_b * PS), lambda i: (i, 0, 0)),   # sent a
        pl.BlockSpec((None, 1, block_b * P), lambda i: (i, 0, 0)),    # para a
    ]
    out_shape = (
        jax.ShapeDtypeStruct((nb, block_b, C), jnp.float32),
        jax.ShapeDtypeStruct((nb, block_b, C), jnp.float32),
        jax.ShapeDtypeStruct((nb, 1, block_b * PSW), jnp.float32),
        jax.ShapeDtypeStruct((nb, 1, block_b * PS), jnp.float32),
        jax.ShapeDtypeStruct((nb, 1, block_b * P), jnp.float32),
    )

    y, logits, wa, sa, pa = pl.pallas_call(
        kernel,
        grid=(nb,),
        in_specs=in_specs,
        out_specs=out_specs,
        out_shape=out_shape,
        compiler_params=pltpu.CompilerParams(
            dimension_semantics=("parallel",),      # megacore / 2 TCs on v7x
            vmem_limit_bytes=vmem_limit,
        ),
    )(x3,
      cast(w_w), b_w, cast(u_w.reshape(1, D)),
      cast(w_s), b_s, cast(u_s.reshape(1, D)),
      cast(w_p), b_p, cast(u_p.reshape(1, D)),
      cast(params["fc_w"]), params["fc_b"])

    # Free XLA reshapes back to the PyTorch output shapes.
    return (y.reshape(B, C),
            logits.reshape(B, C),
            wa.reshape(B, P, S, W, 1),
            sa.reshape(B, P, S, 1),
            pa.reshape(B, P, 1))


# ---------------------------------------------------------------------------
# Params + pure-JAX reference for validation
# ---------------------------------------------------------------------------
def init_params(key, input_size, num_classes):
    ks = jax.random.split(key, 10)

    def lin(k, fan_in, shape):
        return jax.random.normal(k, shape, jnp.float32) / math.sqrt(fan_in)

    params = {}
    for name, (k0, k1, k2) in zip(
        ["word", "sent", "para"],
        [(ks[0], ks[1], ks[2]), (ks[3], ks[4], ks[5]), (ks[6], ks[7], ks[8])],
    ):
        w = lin(k0, input_size, (input_size, input_size))
        b = lin(k1, input_size, (1, input_size))
        u = lin(k2, input_size, (input_size, 1))
        params[name] = (w, b, u)
    params["fc_w"] = lin(ks[9], input_size, (input_size, num_classes))
    params["fc_b"] = jnp.zeros((1, num_classes), jnp.float32)
    return params


def _ref_attn(x, w, b, u):
    h = jnp.tanh(x @ w + b[0])
    s = h @ u
    a = jax.nn.softmax(s, axis=-2)
    return jnp.sum(x * a, axis=-2), a


def _ref_forward(x, params):
    xw, ws = _ref_attn(x, *params["word"])
    xs, ss = _ref_attn(xw, *params["sent"])
    xp, ps = _ref_attn(xs, *params["para"])
    logits = xp @ params["fc_w"] + params["fc_b"][0]
    return jax.nn.softmax(logits, axis=-1), logits, ws, ss, ps


if __name__ == "__main__":
    # batch, paragraphs, sentences, words, feature, classes
    B, P, S, W, D, C = 4, 2, 3, 4, 128, 8
    key = jax.random.PRNGKey(0)
    kx, kp = jax.random.split(key)
    x = jax.random.normal(kx, (B, P, S, W, D), jnp.float32)
    params = init_params(kp, D, C)
    names = ["y", "logits", "word_score", "sent_score", "para_score"]
    refs = _ref_forward(x, params)

    # f32 path: must match the pure-JAX reference tightly.
    fwd = jax.jit(hierarchy_model_forward)
    outs = jax.block_until_ready(fwd(x, params))
    for name, o, r in zip(names, outs, refs):
        assert o.shape == r.shape, (name, o.shape, r.shape)
        err = float(jnp.max(jnp.abs(o - r)))
        assert jnp.allclose(o, r, atol=1e-4, rtol=1e-4), (name, err)

    # bf16 matmul-operand path (per perf review): tolerance re-derived for
    # bf16 rounding of the matmul operands (elementwise math stays f32).
    fwd_bf16 = jax.jit(functools.partial(hierarchy_model_forward,
                                         matmul_dtype=jnp.bfloat16))
    outs_bf16 = jax.block_until_ready(fwd_bf16(x, params))
    for name, o, r in zip(names, outs_bf16, refs):
        assert o.shape == r.shape, (name, o.shape, r.shape)
        err = float(jnp.max(jnp.abs(o - r)))
        assert jnp.allclose(o, r, atol=1e-1, rtol=1e-1), (name, err)

    print("KERNEL_OK")
</pallas_src>

<mosaic_0001>
module attributes {stable_mosaic.version = 11 : i64} {
  func.func @hier_kernel(%arg0: i32, %arg1: memref<1x48x128xf32, #tpu.memory_space<vmem>>, %arg2: memref<128x128xf32, #tpu.memory_space<vmem>>, %arg3: memref<1x128xf32, #tpu.memory_space<vmem>>, %arg4: memref<1x128xf32, #tpu.memory_space<vmem>>, %arg5: memref<128x128xf32, #tpu.memory_space<vmem>>, %arg6: memref<1x128xf32, #tpu.memory_space<vmem>>, %arg7: memref<1x128xf32, #tpu.memory_space<vmem>>, %arg8: memref<128x128xf32, #tpu.memory_space<vmem>>, %arg9: memref<1x128xf32, #tpu.memory_space<vmem>>, %arg10: memref<1x128xf32, #tpu.memory_space<vmem>>, %arg11: memref<128x8xf32, #tpu.memory_space<vmem>>, %arg12: memref<1x8xf32, #tpu.memory_space<vmem>>, %arg13: memref<1x2x8xf32, #tpu.memory_space<vmem>>, %arg14: memref<1x2x8xf32, #tpu.memory_space<vmem>>, %arg15: memref<1x1x48xf32, #tpu.memory_space<vmem>>, %arg16: memref<1x1x12xf32, #tpu.memory_space<vmem>>, %arg17: memref<1x1x4xf32, #tpu.memory_space<vmem>>) attributes {dimension_semantics = [#tpu.dimension_semantics<parallel>], iteration_bounds = array<i64: 2>, scalar_prefetch = 0 : i64, scratch_operands = 0 : i64, tpu.core_type = #tpu.core_type<tc>, window_params = [{transform_indices = @transform_0, window_bounds = array<i64: 1, 48, 128>}, {pipeline_mode = #tpu.pipeline_mode<synchronous>, transform_indices = @transform_1, window_bounds = array<i64: 128, 128>}, {pipeline_mode = #tpu.pipeline_mode<synchronous>, transform_indices = @transform_2, window_bounds = array<i64: 1, 128>}, {pipeline_mode = #tpu.pipeline_mode<synchronous>, transform_indices = @transform_3, window_bounds = array<i64: 1, 128>}, {pipeline_mode = #tpu.pipeline_mode<synchronous>, transform_indices = @transform_4, window_bounds = array<i64: 128, 128>}, {pipeline_mode = #tpu.pipeline_mode<synchronous>, transform_indices = @transform_5, window_bounds = array<i64: 1, 128>}, {pipeline_mode = #tpu.pipeline_mode<synchronous>, transform_indices = @transform_6, window_bounds = array<i64: 1, 128>}, {pipeline_mode = #tpu.pipeline_mode<synchronous>, transform_indices = @transform_7, window_bounds = array<i64: 128, 128>}, {pipeline_mode = #tpu.pipeline_mode<synchronous>, transform_indices = @transform_8, window_bounds = array<i64: 1, 128>}, {pipeline_mode = #tpu.pipeline_mode<synchronous>, transform_indices = @transform_9, window_bounds = array<i64: 1, 128>}, {pipeline_mode = #tpu.pipeline_mode<synchronous>, transform_indices = @transform_10, window_bounds = array<i64: 128, 8>}, {pipeline_mode = #tpu.pipeline_mode<synchronous>, transform_indices = @transform_11, window_bounds = array<i64: 1, 8>}, {transform_indices = @transform_12, window_bounds = array<i64: 1, 2, 8>}, {transform_indices = @transform_13, window_bounds = array<i64: 1, 2, 8>}, {transform_indices = @transform_14, window_bounds = array<i64: 1, 1, 48>}, {transform_indices = @transform_15, window_bounds = array<i64: 1, 1, 12>}, {transform_indices = @transform_16, window_bounds = array<i64: 1, 1, 4>}]} {
    %c0 = arith.constant 0 : index
    %c0_0 = arith.constant 0 : index
    %c0_1 = arith.constant 0 : index
    %0 = vector.load %arg1[%c0, %c0_0, %c0_1] : memref<1x48x128xf32, #tpu.memory_space<vmem>>, vector<1x48x128xf32>
    %1 = vector.shape_cast %0 : vector<1x48x128xf32> to vector<48x128xf32>
    %c0_2 = arith.constant 0 : index
    %c0_3 = arith.constant 0 : index
    %2 = vector.load %arg2[%c0_2, %c0_3] : memref<128x128xf32, #tpu.memory_space<vmem>>, vector<128x128xf32>
    %cst = arith.constant dense<0.000000e+00> : vector<48x128xf32>
    %3 = tpu.matmul %1, %2, %cst {dimension_numbers = #tpu.dot_dimension_numbers<[1], [0], [0], [1], [0, 0, 1, 1], [], []>} : vector<48x128xf32>, vector<128x128xf32>, vector<48x128xf32> -> vector<48x128xf32>
    %c0_4 = arith.constant 0 : index
    %c0_5 = arith.constant 0 : index
    %4 = vector.load %arg3[%c0_4, %c0_5] : memref<1x128xf32, #tpu.memory_space<vmem>>, vector<1x128xf32>
    %5 = vector.broadcast %4 : vector<1x128xf32> to vector<48x128xf32>
    %6 = arith.addf %3, %5 : vector<48x128xf32>
    %7 = math.tanh %6 : vector<48x128xf32>
    %c0_6 = arith.constant 0 : index
    %c0_7 = arith.constant 0 : index
    %8 = vector.load %arg4[%c0_6, %c0_7] : memref<1x128xf32, #tpu.memory_space<vmem>>, vector<1x128xf32>
    %cst_8 = arith.constant dense<0.000000e+00> : vector<1x48xf32>
    %9 = tpu.matmul %8, %7, %cst_8 {dimension_numbers = #tpu.dot_dimension_numbers<[1], [1], [0], [0], [0, 0, 1, 0], [], []>} : vector<1x128xf32>, vector<48x128xf32>, vector<1x48xf32> -> vector<1x48xf32>
    %cst_9 = arith.constant dense<0xFF800000> : vector<1xf32>
    %10 = vector.multi_reduction <maximumf>, %9, %cst_9 [1] : vector<1x48xf32> to vector<1xf32>
    %11 = vector.shape_cast %10 : vector<1xf32> to vector<1x1xf32>
    %12 = vector.broadcast %11 : vector<1x1xf32> to vector<1x48xf32>
    %13 = arith.subf %9, %12 : vector<1x48xf32>
    %14 = math.exp %13 : vector<1x48xf32>
    %15 = tpu.iota {dimensions = array<i32: 0>} : vector<48x12xi32>
    %16 = tpu.iota {dimensions = array<i32: 1>} : vector<48x12xi32>
    %c4_i32 = arith.constant 4 : i32
    %17 = vector.broadcast %c4_i32 : i32 to vector<48x12xi32>
    %18 = arith.muli %16, %17 : vector<48x12xi32>
    %19 = arith.cmpi sge, %15, %18 : vector<48x12xi32>
    %c1_i32 = arith.constant 1 : i32
    %20 = vector.broadcast %c1_i32 : i32 to vector<48x12xi32>
    %21 = arith.addi %16, %20 : vector<48x12xi32>
    %c4_i32_10 = arith.constant 4 : i32
    %22 = vector.broadcast %c4_i32_10 : i32 to vector<48x12xi32>
    %23 = arith.muli %21, %22 : vector<48x12xi32>
    %24 = arith.cmpi slt, %15, %23 : vector<48x12xi32>
    %25 = arith.andi %19, %24 : vector<48x12xi1>
    %26 = arith.extui %25 : vector<48x12xi1> to vector<48x12xi32>
    %27 = arith.sitofp %26 : vector<48x12xi32> to vector<48x12xf32>
    %28 = tpu.iota {dimensions = array<i32: 0>} : vector<12x48xi32>
    %29 = tpu.iota {dimensions = array<i32: 1>} : vector<12x48xi32>
    %c4_i32_11 = arith.constant 4 : i32
    %30 = vector.broadcast %c4_i32_11 : i32 to vector<12x48xi32>
    %31 = arith.muli %28, %30 : vector<12x48xi32>
    %32 = arith.cmpi sge, %29, %31 : vector<12x48xi32>
    %c1_i32_12 = arith.constant 1 : i32
    %33 = vector.broadcast %c1_i32_12 : i32 to vector<12x48xi32>
    %34 = arith.addi %28, %33 : vector<12x48xi32>
    %c4_i32_13 = arith.constant 4 : i32
    %35 = vector.broadcast %c4_i32_13 : i32 to vector<12x48xi32>
    %36 = arith.muli %34, %35 : vector<12x48xi32>
    %37 = arith.cmpi slt, %29, %36 : vector<12x48xi32>
    %38 = arith.andi %32, %37 : vector<12x48xi1>
    %39 = arith.extui %38 : vector<12x48xi1> to vector<12x48xi32>
    %40 = arith.sitofp %39 : vector<12x48xi32> to vector<12x48xf32>
    %cst_14 = arith.constant dense<0.000000e+00> : vector<1x12xf32>
    %41 = tpu.matmul %14, %27, %cst_14 {dimension_numbers = #tpu.dot_dimension_numbers<[1], [0], [0], [1], [0, 0, 1, 1], [], []>} : vector<1x48xf32>, vector<48x12xf32>, vector<1x12xf32> -> vector<1x12xf32>
    %cst_15 = arith.constant dense<0.000000e+00> : vector<1x48xf32>
    %42 = tpu.matmul %41, %40, %cst_15 {dimension_numbers = #tpu.dot_dimension_numbers<[1], [0], [0], [1], [0, 0, 1, 1], [], []>} : vector<1x12xf32>, vector<12x48xf32>, vector<1x48xf32> -> vector<1x48xf32>
    %43 = tpu.reciprocal %42 : vector<1x48xf32> -> vector<1x48xf32>
    %44 = arith.mulf %14, %43 : vector<1x48xf32>
    %45 = vector.broadcast %44 : vector<1x48xf32> to vector<12x48xf32>
    %46 = arith.mulf %40, %45 : vector<12x48xf32>
    %cst_16 = arith.constant dense<0.000000e+00> : vector<12x128xf32>
    %47 = tpu.matmul %46, %1, %cst_16 {dimension_numbers = #tpu.dot_dimension_numbers<[1], [0], [0], [1], [0, 0, 1, 1], [], []>} : vector<12x48xf32>, vector<48x128xf32>, vector<12x128xf32> -> vector<12x128xf32>
    %c0_17 = arith.constant 0 : index
    %c0_18 = arith.constant 0 : index
    %c0_19 = arith.constant 0 : index
    %48 = vector.load %arg15[%c0_17, %c0_18, %c0_19] : memref<1x1x48xf32, #tpu.memory_space<vmem>>, vector<1x1x48xf32>
    %49 = vector.shape_cast %48 : vector<1x1x48xf32> to vector<1x48xf32>
    %50 = vector.shape_cast %44 : vector<1x48xf32> to vector<1x1x48xf32>
    tpu.vector_store %arg15[%c0_17, %c0_18, %c0_19], %50 {strides = array<i32>} : memref<1x1x48xf32, #tpu.memory_space<vmem>>, vector<1x1x48xf32>,
    %c0_20 = arith.constant 0 : index
    %c0_21 = arith.constant 0 : index
    %51 = vector.load %arg5[%c0_20, %c0_21] : memref<128x128xf32, #tpu.memory_space<vmem>>, vector<128x128xf32>
    %cst_22 = arith.constant dense<0.000000e+00> : vector<12x128xf32>
    %52 = tpu.matmul %47, %51, %cst_22 {dimension_numbers = #tpu.dot_dimension_numbers<[1], [0], [0], [1], [0, 0, 1, 1], [], []>} : vector<12x128xf32>, vector<128x128xf32>, vector<12x128xf32> -> vector<12x128xf32>
    %c0_23 = arith.constant 0 : index
    %c0_24 = arith.constant 0 : index
    %53 = vector.load %arg6[%c0_23, %c0_24] : memref<1x128xf32, #tpu.memory_space<vmem>>, vector<1x128xf32>
    %54 = vector.broadcast %53 : vector<1x128xf32> to vector<12x128xf32>
    %55 = arith.addf %52, %54 : vector<12x128xf32>
    %56 = math.tanh %55 : vector<12x128xf32>
    %c0_25 = arith.constant 0 : index
    %c0_26 = arith.constant 0 : index
    %57 = vector.load %arg7[%c0_25, %c0_26] : memref<1x128xf32, #tpu.memory_space<vmem>>, vector<1x128xf32>
    %cst_27 = arith.constant dense<0.000000e+00> : vector<1x12xf32>
    %58 = tpu.matmul %57, %56, %cst_27 {dimension_numbers = #tpu.dot_dimension_numbers<[1], [1], [0], [0], [0, 0, 1, 0], [], []>} : vector<1x128xf32>, vector<12x128xf32>, vector<1x12xf32> -> vector<1x12xf32>
    %cst_28 = arith.constant dense<0xFF800000> : vector<1xf32>
    %59 = vector.multi_reduction <maximumf>, %58, %cst_28 [1] : vector<1x12xf32> to vector<1xf32>
    %60 = vector.shape_cast %59 : vector<1xf32> to vector<1x1xf32>
    %61 = vector.broadcast %60 : vector<1x1xf32> to vector<1x12xf32>
    %62 = arith.subf %58, %61 : vector<1x12xf32>
    %63 = math.exp %62 : vector<1x12xf32>
    %64 = tpu.iota {dimensions = array<i32: 0>} : vector<12x4xi32>
    %65 = tpu.iota {dimensions = array<i32: 1>} : vector<12x4xi32>
    %c3_i32 = arith.constant 3 : i32
    %66 = vector.broadcast %c3_i32 : i32 to vector<12x4xi32>
    %67 = arith.muli %65, %66 : vector<12x4xi32>
    %68 = arith.cmpi sge, %64, %67 : vector<12x4xi32>
    %c1_i32_29 = arith.constant 1 : i32
    %69 = vector.broadcast %c1_i32_29 : i32 to vector<12x4xi32>
    %70 = arith.addi %65, %69 : vector<12x4xi32>
    %c3_i32_30 = arith.constant 3 : i32
    %71 = vector.broadcast %c3_i32_30 : i32 to vector<12x4xi32>
    %72 = arith.muli %70, %71 : vector<12x4xi32>
    %73 = arith.cmpi slt, %64, %72 : vector<12x4xi32>
    %74 = arith.andi %68, %73 : vector<12x4xi1>
    %75 = arith.extui %74 : vector<12x4xi1> to vector<12x4xi32>
    %76 = arith.sitofp %75 : vector<12x4xi32> to vector<12x4xf32>
    %77 = tpu.iota {dimensions = array<i32: 0>} : vector<4x12xi32>
    %78 = tpu.iota {dimensions = array<i32: 1>} : vector<4x12xi32>
    %c3_i32_31 = arith.constant 3 : i32
    %79 = vector.broadcast %c3_i32_31 : i32 to vector<4x12xi32>
    %80 = arith.muli %77, %79 : vector<4x12xi32>
    %81 = arith.cmpi sge, %78, %80 : vector<4x12xi32>
    %c1_i32_32 = arith.constant 1 : i32
    %82 = vector.broadcast %c1_i32_32 : i32 to vector<4x12xi32>
    %83 = arith.addi %77, %82 : vector<4x12xi32>
    %c3_i32_33 = arith.constant 3 : i32
    %84 = vector.broadcast %c3_i32_33 : i32 to vector<4x12xi32>
    %85 = arith.muli %83, %84 : vector<4x12xi32>
    %86 = arith.cmpi slt, %78, %85 : vector<4x12xi32>
    %87 = arith.andi %81, %86 : vector<4x12xi1>
    %88 = arith.extui %87 : vector<4x12xi1> to vector<4x12xi32>
    %89 = arith.sitofp %88 : vector<4x12xi32> to vector<4x12xf32>
    %cst_34 = arith.constant dense<0.000000e+00> : vector<1x4xf32>
    %90 = tpu.matmul %63, %76, %cst_34 {dimension_numbers = #tpu.dot_dimension_numbers<[1], [0], [0], [1], [0, 0, 1, 1], [], []>} : vector<1x12xf32>, vector<12x4xf32>, vector<1x4xf32> -> vector<1x4xf32>
    %cst_35 = arith.constant dense<0.000000e+00> : vector<1x12xf32>
    %91 = tpu.matmul %90, %89, %cst_35 {dimension_numbers = #tpu.dot_dimension_numbers<[1], [0], [0], [1], [0, 0, 1, 1], [], []>} : vector<1x4xf32>, vector<4x12xf32>, vector<1x12xf32> -> vector<1x12xf32>
    %92 = tpu.reciprocal %91 : vector<1x12xf32> -> vector<1x12xf32>
    %93 = arith.mulf %63, %92 : vector<1x12xf32>
    %94 = vector.broadcast %93 : vector<1x12xf32> to vector<4x12xf32>
    %95 = arith.mulf %89, %94 : vector<4x12xf32>
    %cst_36 = arith.constant dense<0.000000e+00> : vector<4x128xf32>
    %96 = tpu.matmul %95, %47, %cst_36 {dimension_numbers = #tpu.dot_dimension_numbers<[1], [0], [0], [1], [0, 0, 1, 1], [], []>} : vector<4x12xf32>, vector<12x128xf32>, vector<4x128xf32> -> vector<4x128xf32>
    %c0_37 = arith.constant 0 : index
    %c0_38 = arith.constant 0 : index
    %c0_39 = arith.constant 0 : index
    %97 = vector.load %arg16[%c0_37, %c0_38, %c0_39] : memref<1x1x12xf32, #tpu.memory_space<vmem>>, vector<1x1x12xf32>
    %98 = vector.shape_cast %97 : vector<1x1x12xf32> to vector<1x12xf32>
    %99 = vector.shape_cast %93 : vector<1x12xf32> to vector<1x1x12xf32>
    tpu.vector_store %arg16[%c0_37, %c0_38, %c0_39], %99 {strides = array<i32>} : memref<1x1x12xf32, #tpu.memory_space<vmem>>, vector<1x1x12xf32>,
    %c0_40 = arith.constant 0 : index
    %c0_41 = arith.constant 0 : index
    %100 = vector.load %arg8[%c0_40, %c0_41] : memref<128x128xf32, #tpu.memory_space<vmem>>, vector<128x128xf32>
    %cst_42 = arith.constant dense<0.000000e+00> : vector<4x128xf32>
    %101 = tpu.matmul %96, %100, %cst_42 {dimension_numbers = #tpu.dot_dimension_numbers<[1], [0], [0], [1], [0, 0, 1, 1], [], []>} : vector<4x128xf32>, vector<128x128xf32>, vector<4x128xf32> -> vector<4x128xf32>
    %c0_43 = arith.constant 0 : index
    %c0_44 = arith.constant 0 : index
    %102 = vector.load %arg9[%c0_43, %c0_44] : memref<1x128xf32, #tpu.memory_space<vmem>>, vector<1x128xf32>
    %103 = vector.broadcast %102 : vector<1x128xf32> to vector<4x128xf32>
    %104 = arith.addf %101, %103 : vector<4x128xf32>
    %105 = math.tanh %104 : vector<4x128xf32>
    %c0_45 = arith.constant 0 : index
    %c0_46 = arith.constant 0 : index
    %106 = vector.load %arg10[%c0_45, %c0_46] : memref<1x128xf32, #tpu.memory_space<vmem>>, vector<1x128xf32>
    %cst_47 = arith.constant dense<0.000000e+00> : vector<1x4xf32>
    %107 = tpu.matmul %106, %105, %cst_47 {dimension_numbers = #tpu.dot_dimension_numbers<[1], [1], [0], [0], [0, 0, 1, 0], [], []>} : vector<1x128xf32>, vector<4x128xf32>, vector<1x4xf32> -> vector<1x4xf32>
    %cst_48 = arith.constant dense<0xFF800000> : vector<1xf32>
    %108 = vector.multi_reduction <maximumf>, %107, %cst_48 [1] : vector<1x4xf32> to vector<1xf32>
    %109 = vector.shape_cast %108 : vector<1xf32> to vector<1x1xf32>
    %110 = vector.broadcast %109 : vector<1x1xf32> to vector<1x4xf32>
    %111 = arith.subf %107, %110 : vector<1x4xf32>
    %112 = math.exp %111 : vector<1x4xf32>
    %113 = tpu.iota {dimensions = array<i32: 0>} : vector<4x2xi32>
    %114 = tpu.iota {dimensions = array<i32: 1>} : vector<4x2xi32>
    %c2_i32 = arith.constant 2 : i32
    %115 = vector.broadcast %c2_i32 : i32 to vector<4x2xi32>
    %116 = arith.muli %114, %115 : vector<4x2xi32>
    %117 = arith.cmpi sge, %113, %116 : vector<4x2xi32>
    %c1_i32_49 = arith.constant 1 : i32
    %118 = vector.broadcast %c1_i32_49 : i32 to vector<4x2xi32>
    %119 = arith.addi %114, %118 : vector<4x2xi32>
    %c2_i32_50 = arith.constant 2 : i32
    %120 = vector.broadcast %c2_i32_50 : i32 to vector<4x2xi32>
    %121 = arith.muli %119, %120 : vector<4x2xi32>
    %122 = arith.cmpi slt, %113, %121 : vector<4x2xi32>
    %123 = arith.andi %117, %122 : vector<4x2xi1>
    %124 = arith.extui %123 : vector<4x2xi1> to vector<4x2xi32>
    %125 = arith.sitofp %124 : vector<4x2xi32> to vector<4x2xf32>
    %126 = tpu.iota {dimensions = array<i32: 0>} : vector<2x4xi32>
    %127 = tpu.iota {dimensions = array<i32: 1>} : vector<2x4xi32>
    %c2_i32_51 = arith.constant 2 : i32
    %128 = vector.broadcast %c2_i32_51 : i32 to vector<2x4xi32>
    %129 = arith.muli %126, %128 : vector<2x4xi32>
    %130 = arith.cmpi sge, %127, %129 : vector<2x4xi32>
    %c1_i32_52 = arith.constant 1 : i32
    %131 = vector.broadcast %c1_i32_52 : i32 to vector<2x4xi32>
    %132 = arith.addi %126, %131 : vector<2x4xi32>
    %c2_i32_53 = arith.constant 2 : i32
    %133 = vector.broadcast %c2_i32_53 : i32 to vector<2x4xi32>
    %134 = arith.muli %132, %133 : vector<2x4xi32>
    %135 = arith.cmpi slt, %127, %134 : vector<2x4xi32>
    %136 = arith.andi %130, %135 : vector<2x4xi1>
    %137 = arith.extui %136 : vector<2x4xi1> to vector<2x4xi32>
    %138 = arith.sitofp %137 : vector<2x4xi32> to vector<2x4xf32>
    %cst_54 = arith.constant dense<0.000000e+00> : vector<1x2xf32>
    %139 = tpu.matmul %112, %125, %cst_54 {dimension_numbers = #tpu.dot_dimension_numbers<[1], [0], [0], [1], [0, 0, 1, 1], [], []>} : vector<1x4xf32>, vector<4x2xf32>, vector<1x2xf32> -> vector<1x2xf32>
    %cst_55 = arith.constant dense<0.000000e+00> : vector<1x4xf32>
    %140 = tpu.matmul %139, %138, %cst_55 {dimension_numbers = #tpu.dot_dimension_numbers<[1], [0], [0], [1], [0, 0, 1, 1], [], []>} : vector<1x2xf32>, vector<2x4xf32>, vector<1x4xf32> -> vector<1x4xf32>
    %141 = tpu.reciprocal %140 : vector<1x4xf32> -> vector<1x4xf32>
    %142 = arith.mulf %112, %141 : vector<1x4xf32>
    %143 = vector.broadcast %142 : vector<1x4xf32> to vector<2x4xf32>
    %144 = arith.mulf %138, %143 : vector<2x4xf32>
    %cst_56 = arith.constant dense<0.000000e+00> : vector<2x128xf32>
    %145 = tpu.matmul %144, %96, %cst_56 {dimension_numbers = #tpu.dot_dimension_numbers<[1], [0], [0], [1], [0, 0, 1, 1], [], []>} : vector<2x4xf32>, vector<4x128xf32>, vector<2x128xf32> -> vector<2x128xf32>
    %c0_57 = arith.constant 0 : index
    %c0_58 = arith.constant 0 : index
    %c0_59 = arith.constant 0 : index
    %146 = vector.load %arg17[%c0_57, %c0_58, %c0_59] : memref<1x1x4xf32, #tpu.memory_space<vmem>>, vector<1x1x4xf32>
    %147 = vector.shape_cast %146 : vector<1x1x4xf32> to vector<1x4xf32>
    %148 = vector.shape_cast %142 : vector<1x4xf32> to vector<1x1x4xf32>
    tpu.vector_store %arg17[%c0_57, %c0_58, %c0_59], %148 {strides = array<i32>} : memref<1x1x4xf32, #tpu.memory_space<vmem>>, vector<1x1x4xf32>,
    %c0_60 = arith.constant 0 : index
    %c0_61 = arith.constant 0 : index
    %149 = vector.load %arg11[%c0_60, %c0_61] : memref<128x8xf32, #tpu.memory_space<vmem>>, vector<128x8xf32>
    %cst_62 = arith.constant dense<0.000000e+00> : vector<2x8xf32>
    %150 = tpu.matmul %145, %149, %cst_62 {dimension_numbers = #tpu.dot_dimension_numbers<[1], [0], [0], [1], [0, 0, 1, 1], [], []>} : vector<2x128xf32>, vector<128x8xf32>, vector<2x8xf32> -> vector<2x8xf32>
    %c0_63 = arith.constant 0 : index
    %c0_64 = arith.constant 0 : index
    %151 = vector.load %arg12[%c0_63, %c0_64] : memref<1x8xf32, #tpu.memory_space<vmem>>, vector<1x8xf32>
    %152 = vector.broadcast %151 : vector<1x8xf32> to vector<2x8xf32>
    %153 = arith.addf %150, %152 : vector<2x8xf32>
    %c0_65 = arith.constant 0 : index
    %c0_66 = arith.constant 0 : index
    %c0_67 = arith.constant 0 : index
    %154 = vector.load %arg14[%c0_65, %c0_66, %c0_67] : memref<1x2x8xf32, #tpu.memory_space<vmem>>, vector<1x2x8xf32>
    %155 = vector.shape_cast %154 : vector<1x2x8xf32> to vector<2x8xf32>
    %156 = vector.shape_cast %153 : vector<2x8xf32> to vector<1x2x8xf32>
    tpu.vector_store %arg14[%c0_65, %c0_66, %c0_67], %156 {strides = array<i32>} : memref<1x2x8xf32, #tpu.memory_space<vmem>>, vector<1x2x8xf32>,
    %cst_68 = arith.constant dense<0xFF800000> : vector<2xf32>
    %157 = vector.multi_reduction <maximumf>, %153, %cst_68 [1] : vector<2x8xf32> to vector<2xf32>
    %158 = vector.shape_cast %157 : vector<2xf32> to vector<2x1xf32>
    %159 = vector.broadcast %158 : vector<2x1xf32> to vector<2x8xf32>
    %160 = arith.subf %153, %159 : vector<2x8xf32>
    %161 = math.exp %160 : vector<2x8xf32>
    %cst_69 = arith.constant dense<0.000000e+00> : vector<2xf32>
    %162 = vector.multi_reduction <add>, %161, %cst_69 [1] : vector<2x8xf32> to vector<2xf32>
    %163 = vector.shape_cast %162 : vector<2xf32> to vector<2x1xf32>
    %164 = tpu.reciprocal %163 : vector<2x1xf32> -> vector<2x1xf32>
    %165 = vector.broadcast %164 : vector<2x1xf32> to vector<2x8xf32>
    %166 = arith.mulf %161, %165 : vector<2x8xf32>
    %c0_70 = arith.constant 0 : index
    %c0_71 = arith.constant 0 : index
    %c0_72 = arith.constant 0 : index
    %167 = vector.load %arg13[%c0_70, %c0_71, %c0_72] : memref<1x2x8xf32, #tpu.memory_space<vmem>>, vector<1x2x8xf32>
    %168 = vector.shape_cast %167 : vector<1x2x8xf32> to vector<2x8xf32>
    %169 = vector.shape_cast %166 : vector<2x8xf32> to vector<1x2x8xf32>
    tpu.vector_store %arg13[%c0_70, %c0_71, %c0_72], %169 {strides = array<i32>} : memref<1x2x8xf32, #tpu.memory_space<vmem>>, vector<1x2x8xf32>,
    return
  }
  func.func @transform_0(%arg0: i32) -> (i32, i32, i32) {
    %c0_i32 = arith.constant 0 : i32
    %c0_i32_0 = arith.constant 0 : i32
    %c0_i32_1 = arith.constant 0 : i32
    return %arg0, %c0_i32, %c0_i32_0 : i32, i32, i32
  }
  func.func @transform_1(%arg0: i32) -> (i32, i32) {
    %c0_i32 = arith.constant 0 : i32
    %c0_i32_0 = arith.constant 0 : i32
    %c0_i32_1 = arith.constant 0 : i32
    return %c0_i32, %c0_i32_0 : i32, i32
  }
  func.func @transform_2(%arg0: i32) -> (i32, i32) {
    %c0_i32 = arith.constant 0 : i32
    %c0_i32_0 = arith.constant 0 : i32
    %c0_i32_1 = arith.constant 0 : i32
    return %c0_i32, %c0_i32_0 : i32, i32
  }
  func.func @transform_3(%arg0: i32) -> (i32, i32) {
    %c0_i32 = arith.constant 0 : i32
    %c0_i32_0 = arith.constant 0 : i32
    %c0_i32_1 = arith.constant 0 : i32
    return %c0_i32, %c0_i32_0 : i32, i32
  }
  func.func @transform_4(%arg0: i32) -> (i32, i32) {
    %c0_i32 = arith.constant 0 : i32
    %c0_i32_0 = arith.constant 0 : i32
    %c0_i32_1 = arith.constant 0 : i32
    return %c0_i32, %c0_i32_0 : i32, i32
  }
  func.func @transform_5(%arg0: i32) -> (i32, i32) {
    %c0_i32 = arith.constant 0 : i32
    %c0_i32_0 = arith.constant 0 : i32
    %c0_i32_1 = arith.constant 0 : i32
    return %c0_i32, %c0_i32_0 : i32, i32
  }
  func.func @transform_6(%arg0: i32) -> (i32, i32) {
    %c0_i32 = arith.constant 0 : i32
    %c0_i32_0 = arith.constant 0 : i32
    %c0_i32_1 = arith.constant 0 : i32
    return %c0_i32, %c0_i32_0 : i32, i32
  }
  func.func @transform_7(%arg0: i32) -> (i32, i32) {
    %c0_i32 = arith.constant 0 : i32
    %c0_i32_0 = arith.constant 0 : i32
    %c0_i32_1 = arith.constant 0 : i32
    return %c0_i32, %c0_i32_0 : i32, i32
  }
  func.func @transform_8(%arg0: i32) -> (i32, i32) {
    %c0_i32 = arith.constant 0 : i32
    %c0_i32_0 = arith.constant 0 : i32
    %c0_i32_1 = arith.constant 0 : i32
    return %c0_i32, %c0_i32_0 : i32, i32
  }
  func.func @transform_9(%arg0: i32) -> (i32, i32) {
    %c0_i32 = arith.constant 0 : i32
    %c0_i32_0 = arith.constant 0 : i32
    %c0_i32_1 = arith.constant 0 : i32
    return %c0_i32, %c0_i32_0 : i32, i32
  }
  func.func @transform_10(%arg0: i32) -> (i32, i32) {
    %c0_i32 = arith.constant 0 : i32
    %c0_i32_0 = arith.constant 0 : i32
    %c0_i32_1 = arith.constant 0 : i32
    return %c0_i32, %c0_i32_0 : i32, i32
  }
  func.func @transform_11(%arg0: i32) -> (i32, i32) {
    %c0_i32 = arith.constant 0 : i32
    %c0_i32_0 = arith.constant 0 : i32
    %c0_i32_1 = arith.constant 0 : i32
    return %c0_i32, %c0_i32_0 : i32, i32
  }
  func.func @transform_12(%arg0: i32) -> (i32, i32, i32) {
    %c0_i32 = arith.constant 0 : i32
    %c0_i32_0 = arith.constant 0 : i32
    %c0_i32_1 = arith.constant 0 : i32
    return %arg0, %c0_i32, %c0_i32_0 : i32, i32, i32
  }
  func.func @transform_13(%arg0: i32) -> (i32, i32, i32) {
    %c0_i32 = arith.constant 0 : i32
    %c0_i32_0 = arith.constant 0 : i32
    %c0_i32_1 = arith.constant 0 : i32
    return %arg0, %c0_i32, %c0_i32_0 : i32, i32, i32
  }
  func.func @transform_14(%arg0: i32) -> (i32, i32, i32) {
    %c0_i32 = arith.constant 0 : i32
    %c0_i32_0 = arith.constant 0 : i32
    %c0_i32_1 = arith.constant 0 : i32
    return %arg0, %c0_i32, %c0_i32_0 : i32, i32, i32
  }
  func.func @transform_15(%arg0: i32) -> (i32, i32, i32) {
    %c0_i32 = arith.constant 0 : i32
    %c0_i32_0 = arith.constant 0 : i32
    %c0_i32_1 = arith.constant 0 : i32
    return %arg0, %c0_i32, %c0_i32_0 : i32, i32, i32
  }
  func.func @transform_16(%arg0: i32) -> (i32, i32, i32) {
    %c0_i32 = arith.constant 0 : i32
    %c0_i32_0 = arith.constant 0 : i32
    %c0_i32_1 = arith.constant 0 : i32
    return %arg0, %c0_i32, %c0_i32_0 : i32, i32, i32
  }
}

</mosaic_0001>

<llo_original>
// kernel: hierarchy_model_forward.1
$region0: #{hierarchy_model_forward.1}
  #allocation0 [shape = 'u32[]', space=smem, size = 0x4, offset = 0x4, fixed_abs, tag = 'smem constant byte address 0x4 - core index']
  #allocation1 [shape = 'u32[144,128]{1,0:T(1,128)}', space=vmem, size = 0x12000, scoped, tag = 'internal scratch']
  %s0 = inlined_call_operand.hbm [shape: f32[2,48,128], index: 0, kind: input, shape index: {}]
  %s1 = inlined_call_operand.vmem [shape: f32[128,128], index: 1, kind: input, shape index: {}]
  %s2 = inlined_call_operand.vmem [shape: f32[1,128], index: 2, kind: input, shape index: {}]
  %s3 = inlined_call_operand.vmem [shape: f32[1,128], index: 3, kind: input, shape index: {}]
  %s4 = inlined_call_operand.hbm [shape: f32[128,128], index: 4, kind: input, shape index: {}]
  %s5 = inlined_call_operand.vmem [shape: f32[1,128], index: 5, kind: input, shape index: {}]
  %s6 = inlined_call_operand.vmem [shape: f32[1,128], index: 6, kind: input, shape index: {}]
  %s7 = inlined_call_operand.hbm [shape: f32[128,128], index: 7, kind: input, shape index: {}]
  %s8 = inlined_call_operand.vmem [shape: f32[1,128], index: 8, kind: input, shape index: {}]
  %s9 = inlined_call_operand.vmem [shape: f32[1,128], index: 9, kind: input, shape index: {}]
  %s10 = inlined_call_operand.vmem [shape: f32[128,8], index: 10, kind: input, shape index: {}]
  %s11 = inlined_call_operand.vmem [shape: f32[1,8], index: 11, kind: input, shape index: {}]
  %s12 = inlined_call_operand.hbm [shape: f32[2,2,8], index: 12, kind: output, shape index: {0}]
  %s13 = inlined_call_operand.hbm [shape: f32[2,2,8], index: 13, kind: output, shape index: {1}]
  %s14 = inlined_call_operand.vmem [shape: f32[2,1,48], index: 14, kind: output, shape index: {2}]
  %s15 = inlined_call_operand.vmem [shape: f32[2,1,12], index: 15, kind: output, shape index: {3}]
  %s16 = inlined_call_operand.vmem [shape: f32[2,1,4], index: 16, kind: output, shape index: {4}]
  %17 = xla_tuple %s12, %s13, %s14, %s15, %s16
  %s18 = sld [smem:[#allocation0]]
  $region125: #{hierarchy_model_forward.1} parent=0
    _
  %s20 = ssub.s32 1, %s18
  %s21 = scalar_select 0, %s20, %s18
  $region1: #{hierarchy_model_forward.1} parent=0
    #allocation2 [shape = 'u8[49152]{0}', space=vmem, size = 0xc000, scoped, tag = 'input window, operand 0']
    #allocation3 [shape = 's32[2]{0}', space=sflag, size = 0x8, scoped, tag = 'scoped memory for hierarchy_model_forward.1']
    #allocation4 [shape = 's32[2]{0}', space=sflag, size = 0x8, scoped, tag = 'scoped memory for hierarchy_model_forward.1']
    #allocation5 [shape = 'u8[65536]{0}', space=vmem, size = 0x10000, scoped, tag = 'input window, operand 4, single buffered']
    #allocation6 [shape = 's32[1]{0}', space=sflag, size = 0x4, scoped, tag = 'scoped memory for hierarchy_model_forward.1']
    #allocation7 [shape = 'u8[65536]{0}', space=vmem, size = 0x10000, scoped, tag = 'input window, operand 7, single buffered']
    #allocation8 [shape = 'u8[2048]{0}', space=vmem, size = 0x800, scoped, tag = 'output window, operand 0']
    #allocation9 [shape = 'u8[2048]{0}', space=vmem, size = 0x800, scoped, tag = 'output window, operand 1']
    #allocation10 [shape = 's32[2]{0}', space=sflag, size = 0x8, scoped, tag = 'scoped memory for hierarchy_model_forward.1']
    %22 = vsyncpa [#allocation3], 0
    %s23 = scalar_lea.sflag [#allocation3], 1
    %24 = vsyncpa %s23, 0
    %25 = vsyncpa [#allocation6], 0
    %26 = vsyncpa [#allocation4], 0
    %s27 = scalar_lea.sflag [#allocation4], 1
    %28 = vsyncpa %s27, 0
    %29 = vsyncpa [#allocation10], 0
    %s30 = scalar_lea.sflag [#allocation10], 1
    %31 = vsyncpa %s30, 0
    loop: start=0, step=1, limit=4
    $region2: #{hierarchy_model_forward.1} parent=1 // loop_pre_header
      _
    $region3: #{hierarchy_model_forward.1} parent=1 // loop_header
      %s33 = sphi 0, %s37
      %p34 = scmp.ge.s32.totalorder %s33, 4
      %s43 = sphi 0, %s45
      %s46 = sphi 0, %s43
      %s47 = sphi 0, %s46
      %s63 = sphi 0, %s47
      %s67 = sphi 0, %s67
      %s69 = sphi 0, %s67
      %s70 = sphi 0, %s69
      %s84 = sphi 0, %s70
      %s88 = sphi 0, %s88
      %s90 = sphi 0, %s88
      %s91 = sphi 0, %s90
      %s105 = sphi 0, %s91
      %s109 = sphi 0, %s109
      %s111 = sphi 0, %s109
      %s112 = sphi 0, %s111
      %s126 = sphi 0, %s112
      %s130 = sphi 0, %s130
      %s132 = sphi 0, %s130
      %s133 = sphi 0, %s132
      %s147 = sphi 0, %s133
      %s151 = sphi 0, %s151
      %s153 = sphi 0, %s151
      %s154 = sphi 0, %s153
      %s168 = sphi 0, %s154
      %s172 = sphi 0, %s172
      %s174 = sphi 0, %s172
      %s175 = sphi 0, %s174
      %s189 = sphi 0, %s175
      %s193 = sphi 0, %s193
      %s195 = sphi 0, %s193
      %s196 = sphi 0, %s195
      %s210 = sphi 0, %s196
      %s214 = sphi 0, %s214
      %s216 = sphi 0, %s214
      %s217 = sphi 0, %s216
      %s231 = sphi 0, %s217
      %s235 = sphi 0, %s235
      %s237 = sphi 0, %s235
      %s238 = sphi 0, %s237
      %s252 = sphi 0, %s238
      %s256 = sphi 0, %s256
      %s258 = sphi 0, %s256
      %s259 = sphi 0, %s258
      %s273 = sphi 0, %s259
      %s277 = sphi 0, %s277
      %s279 = sphi 0, %s277
      %s280 = sphi 0, %s279
      %s294 = sphi 0, %s280
      %s300 = sphi 0, %s302
      %s303 = sphi 0, %s300
      %s304 = sphi 0, %s303
      %s320 = sphi 0, %s304
      %s326 = sphi 0, %s328
      %s329 = sphi 0, %s326
      %s330 = sphi 0, %s329
      %s346 = sphi 0, %s330
      %s352 = sphi 0, %s354
      %s355 = sphi 0, %s352
      %s356 = sphi 0, %s355
      %s372 = sphi 0, %s356
      %s378 = sphi 0, %s380
      %s381 = sphi 0, %s378
      %s382 = sphi 0, %s381
      %s398 = sphi 0, %s382
      %s404 = sphi 0, %s406
      %s407 = sphi 0, %s404
      %s408 = sphi 0, %s407
      %s424 = sphi 0, %s408
    $region4: #{hierarchy_model_forward.1} parent=1 // loop_header_branch
      %36 = sbr.rel (%p34) target = $region8
    $region5: #{hierarchy_model_forward.1} parent=1 // loop_body
      %s38 = ssub.s32 %s33, 1
      %s39 = ssub.s32 %s33, 2
      %s40 = sadd.s32 %s33, 1
      %s41 = ssub.s32 %s33, %s40
      %p42 = scmp.eq.s32.totalorder %s41, 0
      %s44 = sadd.s32 %s43, 1
      %s45 = scalar_select %p42, %s43, %s44
      %p48 = pneg %p42
      %p49 = scmp.eq.s32.totalorder %s33, 1
      %p50 = por %p48, %p49
      %p51 = scmp.ne.s32.totalorder %s43, %s46
      %p52 = scmp.eq.s32.totalorder %s33, 0
      %p53 = por %p51, %p52
      %p54 = scmp.ne.s32.totalorder %s43, %s46
      %p55 = scmp.eq.s32.totalorder %s38, 1
      %p56 = por %p54, %p55
      %p57 = scmp.ne.s32.totalorder %s46, %s47
      %p58 = scmp.eq.s32.totalorder %s38, 0
      %p59 = por %p57, %p58
      %p60 = scmp.ne.s32.totalorder %s46, %s47
      %p61 = scmp.eq.s32.totalorder %s39, 1
      %p62 = por %p60, %p61
      %p64 = scmp.ne.s32.totalorder %s47, %s63
      %p65 = scmp.eq.s32.totalorder %s39, 0
      %p66 = por %p64, %p65
      %s68 = sadd.s32 %s67, 1
      %p71 = scmp.eq.s32.totalorder %s33, 1
      %p72 = scmp.ne.s32.totalorder %s67, %s69
      %p73 = scmp.eq.s32.totalorder %s33, 0
      %p74 = por %p72, %p73
      %p75 = scmp.ne.s32.totalorder %s67, %s69
      %p76 = scmp.eq.s32.totalorder %s38, 1
      %p77 = por %p75, %p76
      %p78 = scmp.ne.s32.totalorder %s69, %s70
      %p79 = scmp.eq.s32.totalorder %s38, 0
      %p80 = por %p78, %p79
      %p81 = scmp.ne.s32.totalorder %s69, %s70
      %p82 = scmp.eq.s32.totalorder %s39, 1
      %p83 = por %p81, %p82
      %p85 = scmp.ne.s32.totalorder %s70, %s84
      %p86 = scmp.eq.s32.totalorder %s39, 0
      %p87 = por %p85, %p86
      %s89 = sadd.s32 %s88, 1
      %p92 = scmp.eq.s32.totalorder %s33, 1
      %p93 = scmp.ne.s32.totalorder %s88, %s90
      %p94 = scmp.eq.s32.totalorder %s33, 0
      %p95 = por %p93, %p94
      %p96 = scmp.ne.s32.totalorder %s88, %s90
      %p97 = scmp.eq.s32.totalorder %s38, 1
      %p98 = por %p96, %p97
      %p99 = scmp.ne.s32.totalorder %s90, %s91
      %p100 = scmp.eq.s32.totalorder %s38, 0
      %p101 = por %p99, %p100
      %p102 = scmp.ne.s32.totalorder %s90, %s91
      %p103 = scmp.eq.s32.totalorder %s39, 1
      %p104 = por %p102, %p103
      %p106 = scmp.ne.s32.totalorder %s91, %s105
      %p107 = scmp.eq.s32.totalorder %s39, 0
      %p108 = por %p106, %p107
      %s110 = sadd.s32 %s109, 1
      %p113 = scmp.eq.s32.totalorder %s33, 1
      %p114 = scmp.ne.s32.totalorder %s109, %s111
      %p115 = scmp.eq.s32.totalorder %s33, 0
      %p116 = por %p114, %p115
      %p117 = scmp.ne.s32.totalorder %s109, %s111
      %p118 = scmp.eq.s32.totalorder %s38, 1
      %p119 = por %p117, %p118
      %p120 = scmp.ne.s32.totalorder %s111, %s112
      %p121 = scmp.eq.s32.totalorder %s38, 0
      %p122 = por %p120, %p121
      %p123 = scmp.ne.s32.totalorder %s111, %s112
      %p124 = scmp.eq.s32.totalorder %s39, 1
      %p125 = por %p123, %p124
      %p127 = scmp.ne.s32.totalorder %s112, %s126
      %p128 = scmp.eq.s32.totalorder %s39, 0
      %p129 = por %p127, %p128
      %s131 = sadd.s32 %s130, 1
      %p134 = scmp.eq.s32.totalorder %s33, 1
      %p135 = scmp.ne.s32.totalorder %s130, %s132
      %p136 = scmp.eq.s32.totalorder %s33, 0
      %p137 = por %p135, %p136
      %p138 = scmp.ne.s32.totalorder %s130, %s132
      %p139 = scmp.eq.s32.totalorder %s38, 1
      %p140 = por %p138, %p139
      %p141 = scmp.ne.s32.totalorder %s132, %s133
      %p142 = scmp.eq.s32.totalorder %s38, 0
      %p143 = por %p141, %p142
      %p144 = scmp.ne.s32.totalorder %s132, %s133
      %p145 = scmp.eq.s32.totalorder %s39, 1
      %p146 = por %p144, %p145
      %p148 = scmp.ne.s32.totalorder %s133, %s147
      %p149 = scmp.eq.s32.totalorder %s39, 0
      %p150 = por %p148, %p149
      %s152 = sadd.s32 %s151, 1
      %p155 = scmp.eq.s32.totalorder %s33, 1
      %p156 = scmp.ne.s32.totalorder %s151, %s153
      %p157 = scmp.eq.s32.totalorder %s33, 0
      %p158 = por %p156, %p157
      %p159 = scmp.ne.s32.totalorder %s151, %s153
      %p160 = scmp.eq.s32.totalorder %s38, 1
      %p161 = por %p159, %p160
      %p162 = scmp.ne.s32.totalorder %s153, %s154
      %p163 = scmp.eq.s32.totalorder %s38, 0
      %p164 = por %p162, %p163
      %p165 = scmp.ne.s32.totalorder %s153, %s154
      %p166 = scmp.eq.s32.totalorder %s39, 1
      %p167 = por %p165, %p166
      %p169 = scmp.ne.s32.totalorder %s154, %s168
      %p170 = scmp.eq.s32.totalorder %s39, 0
      %p171 = por %p169, %p170
      %s173 = sadd.s32 %s172, 1
      %p176 = scmp.eq.s32.totalorder %s33, 1
      %p177 = scmp.ne.s32.totalorder %s172, %s174
      %p178 = scmp.eq.s32.totalorder %s33, 0
      %p179 = por %p177, %p178
      %p180 = scmp.ne.s32.totalorder %s172, %s174
      %p181 = scmp.eq.s32.totalorder %s38, 1
      %p182 = por %p180, %p181
      %p183 = scmp.ne.s32.totalorder %s174, %s175
      %p184 = scmp.eq.s32.totalorder %s38, 0
      %p185 = por %p183, %p184
      %p186 = scmp.ne.s32.totalorder %s174, %s175
      %p187 = scmp.eq.s32.totalorder %s39, 1
      %p188 = por %p186, %p187
      %p190 = scmp.ne.s32.totalorder %s175, %s189
      %p191 = scmp.eq.s32.totalorder %s39, 0
      %p192 = por %p190, %p191
      %s194 = sadd.s32 %s193, 1
      %p197 = scmp.eq.s32.totalorder %s33, 1
      %p198 = scmp.ne.s32.totalorder %s193, %s195
      %p199 = scmp.eq.s32.totalorder %s33, 0
      %p200 = por %p198, %p199
      %p201 = scmp.ne.s32.totalorder %s193, %s195
      %p202 = scmp.eq.s32.totalorder %s38, 1
      %p203 = por %p201, %p202
      %p204 = scmp.ne.s32.totalorder %s195, %s196
      %p205 = scmp.eq.s32.totalorder %s38, 0
      %p206 = por %p204, %p205
      %p207 = scmp.ne.s32.totalorder %s195, %s196
      %p208 = scmp.eq.s32.totalorder %s39, 1
      %p209 = por %p207, %p208
      %p211 = scmp.ne.s32.totalorder %s196, %s210
      %p212 = scmp.eq.s32.totalorder %s39, 0
      %p213 = por %p211, %p212
      %s215 = sadd.s32 %s214, 1
      %p218 = scmp.eq.s32.totalorder %s33, 1
      %p219 = scmp.ne.s32.totalorder %s214, %s216
      %p220 = scmp.eq.s32.totalorder %s33, 0
      %p221 = por %p219, %p220
      %p222 = scmp.ne.s32.totalorder %s214, %s216
      %p223 = scmp.eq.s32.totalorder %s38, 1
      %p224 = por %p222, %p223
      %p225 = scmp.ne.s32.totalorder %s216, %s217
      %p226 = scmp.eq.s32.totalorder %s38, 0
      %p227 = por %p225, %p226
      %p228 = scmp.ne.s32.totalorder %s216, %s217
      %p229 = scmp.eq.s32.totalorder %s39, 1
      %p230 = por %p228, %p229
      %p232 = scmp.ne.s32.totalorder %s217, %s231
      %p233 = scmp.eq.s32.totalorder %s39, 0
      %p234 = por %p232, %p233
      %s236 = sadd.s32 %s235, 1
      %p239 = scmp.eq.s32.totalorder %s33, 1
      %p240 = scmp.ne.s32.totalorder %s235, %s237
      %p241 = scmp.eq.s32.totalorder %s33, 0
      %p242 = por %p240, %p241
      %p243 = scmp.ne.s32.totalorder %s235, %s237
      %p244 = scmp.eq.s32.totalorder %s38, 1
      %p245 = por %p243, %p244
      %p246 = scmp.ne.s32.totalorder %s237, %s238
      %p247 = scmp.eq.s32.totalorder %s38, 0
      %p248 = por %p246, %p247
      %p249 = scmp.ne.s32.totalorder %s237, %s238
      %p250 = scmp.eq.s32.totalorder %s39, 1
      %p251 = por %p249, %p250
      %p253 = scmp.ne.s32.totalorder %s238, %s252
      %p254 = scmp.eq.s32.totalorder %s39, 0
      %p255 = por %p253, %p254
      %s257 = sadd.s32 %s256, 1
      %p260 = scmp.eq.s32.totalorder %s33, 1
      %p261 = scmp.ne.s32.totalorder %s256, %s258
      %p262 = scmp.eq.s32.totalorder %s33, 0
      %p263 = por %p261, %p262
      %p264 = scmp.ne.s32.totalorder %s256, %s258
      %p265 = scmp.eq.s32.totalorder %s38, 1
      %p266 = por %p264, %p265
      %p267 = scmp.ne.s32.totalorder %s258, %s259
      %p268 = scmp.eq.s32.totalorder %s38, 0
      %p269 = por %p267, %p268
      %p270 = scmp.ne.s32.totalorder %s258, %s259
      %p271 = scmp.eq.s32.totalorder %s39, 1
      %p272 = por %p270, %p271
      %p274 = scmp.ne.s32.totalorder %s259, %s273
      %p275 = scmp.eq.s32.totalorder %s39, 0
      %p276 = por %p274, %p275
      %s278 = sadd.s32 %s277, 1
      %p281 = scmp.eq.s32.totalorder %s33, 1
      %p282 = scmp.ne.s32.totalorder %s277, %s279
      %p283 = scmp.eq.s32.totalorder %s33, 0
      %p284 = por %p282, %p283
      %p285 = scmp.ne.s32.totalorder %s277, %s279
      %p286 = scmp.eq.s32.totalorder %s38, 1
      %p287 = por %p285, %p286
      %p288 = scmp.ne.s32.totalorder %s279, %s280
      %p289 = scmp.eq.s32.totalorder %s38, 0
      %p290 = por %p288, %p289
      %p291 = scmp.ne.s32.totalorder %s279, %s280
      %p292 = scmp.eq.s32.totalorder %s39, 1
      %p293 = por %p291, %p292
      %p295 = scmp.ne.s32.totalorder %s280, %s294
      %p296 = scmp.eq.s32.totalorder %s39, 0
      %p297 = por %p295, %p296
      %s298 = ssub.s32 %s33, %s40
      %p299 = scmp.eq.s32.totalorder %s298, 0
      %s301 = sadd.s32 %s300, 1
      %s302 = scalar_select %p299, %s300, %s301
      %p305 = pneg %p299
      %p306 = scmp.eq.s32.totalorder %s33, 1
      %p307 = por %p305, %p306
      %p308 = scmp.ne.s32.totalorder %s300, %s303
      %p309 = scmp.eq.s32.totalorder %s33, 0
      %p310 = por %p308, %p309
      %p311 = scmp.ne.s32.totalorder %s300, %s303
      %p312 = scmp.eq.s32.totalorder %s38, 1
      %p313 = por %p311, %p312
      %p314 = scmp.ne.s32.totalorder %s303, %s304
      %p315 = scmp.eq.s32.totalorder %s38, 0
      %p316 = por %p314, %p315
      %p317 = scmp.ne.s32.totalorder %s303, %s304
      %p318 = scmp.eq.s32.totalorder %s39, 1
      %p319 = por %p317, %p318
      %p321 = scmp.ne.s32.totalorder %s304, %s320
      %p322 = scmp.eq.s32.totalorder %s39, 0
      %p323 = por %p321, %p322
      %s324 = ssub.s32 %s33, %s40
      %p325 = scmp.eq.s32.totalorder %s324, 0
      %s327 = sadd.s32 %s326, 1
      %s328 = scalar_select %p325, %s326, %s327
      %p331 = pneg %p325
      %p332 = scmp.eq.s32.totalorder %s33, 1
      %p333 = por %p331, %p332
      %p334 = scmp.ne.s32.totalorder %s326, %s329
      %p335 = scmp.eq.s32.totalorder %s33, 0
      %p336 = por %p334, %p335
      %p337 = scmp.ne.s32.totalorder %s326, %s329
      %p338 = scmp.eq.s32.totalorder %s38, 1
      %p339 = por %p337, %p338
      %p340 = scmp.ne.s32.totalorder %s329, %s330
      %p341 = scmp.eq.s32.totalorder %s38, 0
      %p342 = por %p340, %p341
      %p343 = scmp.ne.s32.totalorder %s329, %s330
      %p344 = scmp.eq.s32.totalorder %s39, 1
      %p345 = por %p343, %p344
      %p347 = scmp.ne.s32.totalorder %s330, %s346
      %p348 = scmp.eq.s32.totalorder %s39, 0
      %p349 = por %p347, %p348
      %s350 = ssub.s32 %s33, %s40
      %p351 = scmp.eq.s32.totalorder %s350, 0
      %s353 = sadd.s32 %s352, 1
      %s354 = scalar_select %p351, %s352, %s353
      %p357 = pneg %p351
      %p358 = scmp.eq.s32.totalorder %s33, 1
      %p359 = por %p357, %p358
      %p360 = scmp.ne.s32.totalorder %s352, %s355
      %p361 = scmp.eq.s32.totalorder %s33, 0
      %p362 = por %p360, %p361
      %p363 = scmp.ne.s32.totalorder %s352, %s355
      %p364 = scmp.eq.s32.totalorder %s38, 1
      %p365 = por %p363, %p364
      %p366 = scmp.ne.s32.totalorder %s355, %s356
      %p367 = scmp.eq.s32.totalorder %s38, 0
      %p368 = por %p366, %p367
      %p369 = scmp.ne.s32.totalorder %s355, %s356
      %p370 = scmp.eq.s32.totalorder %s39, 1
      %p371 = por %p369, %p370
      %p373 = scmp.ne.s32.totalorder %s356, %s372
      %p374 = scmp.eq.s32.totalorder %s39, 0
      %p375 = por %p373, %p374
      %s376 = ssub.s32 %s33, %s40
      %p377 = scmp.eq.s32.totalorder %s376, 0
      %s379 = sadd.s32 %s378, 1
      %s380 = scalar_select %p377, %s378, %s379
      %p383 = pneg %p377
      %p384 = scmp.eq.s32.totalorder %s33, 1
      %p385 = por %p383, %p384
      %p386 = scmp.ne.s32.totalorder %s378, %s381
      %p387 = scmp.eq.s32.totalorder %s33, 0
      %p388 = por %p386, %p387
      %p389 = scmp.ne.s32.totalorder %s378, %s381
      %p390 = scmp.eq.s32.totalorder %s38, 1
      %p391 = por %p389, %p390
      %p392 = scmp.ne.s32.totalorder %s381, %s382
      %p393 = scmp.eq.s32.totalorder %s38, 0
      %p394 = por %p392, %p393
      %p395 = scmp.ne.s32.totalorder %s381, %s382
      %p396 = scmp.eq.s32.totalorder %s39, 1
      %p397 = por %p395, %p396
      %p399 = scmp.ne.s32.totalorder %s382, %s398
      %p400 = scmp.eq.s32.totalorder %s39, 0
      %p401 = por %p399, %p400
      %s402 = ssub.s32 %s33, %s40
      %p403 = scmp.eq.s32.totalorder %s402, 0
      %s405 = sadd.s32 %s404, 1
      %s406 = scalar_select %p403, %s404, %s405
      %p409 = pneg %p403
      %p410 = scmp.eq.s32.totalorder %s33, 1
      %p411 = por %p409, %p410
      %p412 = scmp.ne.s32.totalorder %s404, %s407
      %p413 = scmp.eq.s32.totalorder %s33, 0
      %p414 = por %p412, %p413
      %p415 = scmp.ne.s32.totalorder %s404, %s407
      %p416 = scmp.eq.s32.totalorder %s38, 1
      %p417 = por %p415, %p416
      %p418 = scmp.ne.s32.totalorder %s407, %s408
      %p419 = scmp.eq.s32.totalorder %s38, 0
      %p420 = por %p418, %p419
      %p421 = scmp.ne.s32.totalorder %s407, %s408
      %p422 = scmp.eq.s32.totalorder %s39, 1
      %p423 = por %p421, %p422
      %p425 = scmp.ne.s32.totalorder %s408, %s424
      %p426 = scmp.eq.s32.totalorder %s39, 0
      %p427 = por %p425, %p426
      %p428 = scmp.le.s32.totalorder 1, %s33
      %p429 = scmp.lt.s32.totalorder %s33, 3
      %p430 = pnand %p428, %p429
      %p431 = pneg %p430
      // Predicated region
      $region9: #{hierarchy_model_forward.1} parent=5 // pred_check
        _
      $region10: #{hierarchy_model_forward.1} parent=5 // pred_check_branch
        %433 = sbr.rel (%p430) target = $region12
      $region11: #{hierarchy_model_forward.1} parent=5 // pred_region
        %s434 = ssub.s32 %s33, 1
        // Predicated region
        $region13: #{hierarchy_model_forward.1} parent=11 // pred_check
          %p435 = pneg %p80
        $region14: #{hierarchy_model_forward.1} parent=11 // pred_check_branch
          %437 = sbr.rel (%p435) target = $region16
        $region15: #{hierarchy_model_forward.1} parent=11 // pred_region
          _
        $region16: #{hierarchy_model_forward.1} parent=11 // pred_fallthru
          _
        // Predicated region
        $region17: #{hierarchy_model_forward.1} parent=11 // pred_check
          %p438 = pneg %p101
        $region18: #{hierarchy_model_forward.1} parent=11 // pred_check_branch
          %440 = sbr.rel (%p438) target = $region20
        $region19: #{hierarchy_model_forward.1} parent=11 // pred_region
          _
        $region20: #{hierarchy_model_forward.1} parent=11 // pred_fallthru
          _
        // Predicated region
        $region21: #{hierarchy_model_forward.1} parent=11 // pred_check
          %p441 = pneg %p122
        $region22: #{hierarchy_model_forward.1} parent=11 // pred_check_branch
          %443 = sbr.rel (%p441) target = $region24
        $region23: #{hierarchy_model_forward.1} parent=11 // pred_region
          _
        $region24: #{hierarchy_model_forward.1} parent=11 // pred_fallthru
          _
        // Predicated region
        $region25: #{hierarchy_model_forward.1} parent=11 // pred_check
          %p444 = pneg %p143
        $region26: #{hierarchy_model_forward.1} parent=11 // pred_check_branch
          %446 = sbr.rel (%p444) target = $region28
        $region27: #{hierarchy_model_forward.1} parent=11 // pred_region
          %s448 = ssub.s32 2048, 2048
          %449 = vsyncadd [#allocation6], %s448
          %s450 = sshll.u32 [#allocation5], 4
          %s451 = int_to_ptr.vmem [resolvable:$true] %s450
          %456 = dma.hbm_to_vmem [thread:$0]  %s4, 2048, %s451, [#allocation6], 128, 128, 8
        $region28: #{hierarchy_model_forward.1} parent=11 // pred_fallthru
          _
        // Predicated region
        $region29: #{hierarchy_model_forward.1} parent=11 // pred_check
          %p457 = pneg %p164
        $region30: #{hierarchy_model_forward.1} parent=11 // pred_check_branch
          %459 = sbr.rel (%p457) target = $region32
        $region31: #{hierarchy_model_forward.1} parent=11 // pred_region
          _
        $region32: #{hierarchy_model_forward.1} parent=11 // pred_fallthru
          _
        // Predicated region
        $region33: #{hierarchy_model_forward.1} parent=11 // pred_check
          %p460 = pneg %p185
        $region34: #{hierarchy_model_forward.1} parent=11 // pred_check_branch
          %462 = sbr.rel (%p460) target = $region36
        $region35: #{hierarchy_model_forward.1} parent=11 // pred_region
          _
        $region36: #{hierarchy_model_forward.1} parent=11 // pred_fallthru
          _
        // Predicated region
        $region37: #{hierarchy_model_forward.1} parent=11 // pred_check
          %p463 = pneg %p206
        $region38: #{hierarchy_model_forward.1} parent=11 // pred_check_branch
          %465 = sbr.rel (%p463) target = $region40
        $region39: #{hierarchy_model_forward.1} parent=11 // pred_region
          %s467 = ssub.s32 2048, 2048
          %468 = vsyncadd [#allocation6], %s467
          %s469 = sshll.u32 [#allocation7], 4
          %s470 = int_to_ptr.vmem [resolvable:$true] %s469
          %475 = dma.hbm_to_vmem [thread:$0]  %s7, 2048, %s470, [#allocation6], 128, 128, 8
        $region40: #{hierarchy_model_forward.1} parent=11 // pred_fallthru
          _
        // Predicated region
        $region41: #{hierarchy_model_forward.1} parent=11 // pred_check
          %p476 = pneg %p227
        $region42: #{hierarchy_model_forward.1} parent=11 // pred_check_branch
          %478 = sbr.rel (%p476) target = $region44
        $region43: #{hierarchy_model_forward.1} parent=11 // pred_region
          _
        $region44: #{hierarchy_model_forward.1} parent=11 // pred_fallthru
          _
        // Predicated region
        $region45: #{hierarchy_model_forward.1} parent=11 // pred_check
          %p479 = pneg %p248
        $region46: #{hierarchy_model_forward.1} parent=11 // pred_check_branch
          %481 = sbr.rel (%p479) target = $region48
        $region47: #{hierarchy_model_forward.1} parent=11 // pred_region
          _
        $region48: #{hierarchy_model_forward.1} parent=11 // pred_fallthru
          _
        // Predicated region
        $region49: #{hierarchy_model_forward.1} parent=11 // pred_check
          %p482 = pneg %p269
        $region50: #{hierarchy_model_forward.1} parent=11 // pred_check_branch
          %484 = sbr.rel (%p482) target = $region52
        $region51: #{hierarchy_model_forward.1} parent=11 // pred_region
          _
        $region52: #{hierarchy_model_forward.1} parent=11 // pred_fallthru
          _
        // Predicated region
        $region53: #{hierarchy_model_forward.1} parent=11 // pred_check
          %p485 = pneg %p290
        $region54: #{hierarchy_model_forward.1} parent=11 // pred_check_branch
          %487 = sbr.rel (%p485) target = $region56
        $region55: #{hierarchy_model_forward.1} parent=11 // pred_region
          _
        $region56: #{hierarchy_model_forward.1} parent=11 // pred_fallthru
          _
      $region12: #{hierarchy_model_forward.1} parent=5 // pred_fallthru
        _
      %p488 = scmp.lt.s32.totalorder %s33, 2
      // Predicated region
      $region57: #{hierarchy_model_forward.1} parent=5 // pred_check
        %p489 = pneg %p488
      $region58: #{hierarchy_model_forward.1} parent=5 // pred_check_branch
        %491 = sbr.rel (%p489) target = $region60
      $region59: #{hierarchy_model_forward.1} parent=5 // pred_region
        // Predicated region
        $region61: #{hierarchy_model_forward.1} parent=59 // pred_check
          %p492 = pneg %p53
        $region62: #{hierarchy_model_forward.1} parent=59 // pred_check_branch
          %494 = sbr.rel (%p492) target = $region64
        $region63: #{hierarchy_model_forward.1} parent=59 // pred_region
          %s495 = sand.u32 %s43, 1
          %s496 = scalar_lea.sflag [#allocation3], %s495
          %s497 = sand.u32 %s43, 1
          %s498 = smul.addr %s497, 48
          %s499 = scalar_lea.vmem [#allocation2], %s498
          %s501 = ssub.s32 768, 768
          %502 = vsyncadd %s496, %s501
          %s503 = smul.addr %s33, 6
          %s504 = smul.addr %s503, 128
          %s505 = scalar_lea.hbm %s0, %s504
          %s506 = sshll.u32 %s499, 4
          %s507 = int_to_ptr.vmem [resolvable:$true] %s506
          %512 = dma.hbm_to_vmem [thread:$0]  %s505, 768, %s507, %s496, 128, 128, 8
        $region64: #{hierarchy_model_forward.1} parent=59 // pred_fallthru
          _
      $region60: #{hierarchy_model_forward.1} parent=5 // pred_fallthru
        _
      %p513 = scmp.le.s32.totalorder 1, %s33
      %p514 = scmp.lt.s32.totalorder %s33, 3
      %p515 = pnand %p513, %p514
      %p516 = pneg %p515
      // Predicated region
      $region65: #{hierarchy_model_forward.1} parent=5 // pred_check
        _
      $region66: #{hierarchy_model_forward.1} parent=5 // pred_check_branch
        %518 = sbr.rel (%p515) target = $region68
      $region67: #{hierarchy_model_forward.1} parent=5 // pred_region
        %s519 = ssub.s32 %s33, 1
        %s520 = sand.u32 %s46, 1
        %s521 = scalar_lea.sflag [#allocation3], %s520
        %s522 = sand.u32 %s46, 1
        %s523 = smul.addr %s522, 48
        %s524 = scalar_lea.vmem [#allocation2], %s523
        // Predicated region
        $region69: #{hierarchy_model_forward.1} parent=67 // pred_check
          %p525 = pneg %p59
        $region70: #{hierarchy_model_forward.1} parent=67 // pred_check_branch
          %527 = sbr.rel (%p525) target = $region72
        $region71: #{hierarchy_model_forward.1} parent=67 // pred_region
          %528 = dma.done %s521, 768
        $region72: #{hierarchy_model_forward.1} parent=67 // pred_fallthru
          _
        // Predicated region
        $region73: #{hierarchy_model_forward.1} parent=67 // pred_check
          %p529 = pneg %p143
        $region74: #{hierarchy_model_forward.1} parent=67 // pred_check_branch
          %531 = sbr.rel (%p529) target = $region76
        $region75: #{hierarchy_model_forward.1} parent=67 // pred_region
          %532 = dma.done [#allocation6], 2048
        $region76: #{hierarchy_model_forward.1} parent=67 // pred_fallthru
          _
        // Predicated region
        $region77: #{hierarchy_model_forward.1} parent=67 // pred_check
          %p533 = pneg %p206
        $region78: #{hierarchy_model_forward.1} parent=67 // pred_check_branch
          %535 = sbr.rel (%p533) target = $region80
        $region79: #{hierarchy_model_forward.1} parent=67 // pred_region
          %536 = dma.done [#allocation6], 2048
        $region80: #{hierarchy_model_forward.1} parent=67 // pred_fallthru
          _
        %s537 = sand.u32 %s46, 1
        %s538 = scalar_lea.sflag [#allocation3], %s537
        %s539 = sand.u32 %s46, 1
        %s540 = smul.addr %s539, 48
        %s541 = scalar_lea.vmem [#allocation2], %s540
        %p542 = pneg %p59
        %p543 = pneg %p56
        %p544 = pneg %p80
        %p545 = pneg %p77
        %p546 = pneg %p101
        %p547 = pneg %p98
        %p548 = pneg %p122
        %p549 = pneg %p119
        %p550 = pneg %p143
        %p551 = pneg %p140
        %p552 = pneg %p164
        %p553 = pneg %p161
        %p554 = pneg %p185
        %p555 = pneg %p182
        %p556 = pneg %p206
        %p557 = pneg %p203
        %p558 = pneg %p227
        %p559 = pneg %p224
        %p560 = pneg %p248
        %p561 = pneg %p245
        %p562 = pneg %p269
        %p563 = pneg %p266
        %p564 = pneg %p290
        %p565 = pneg %p287
        %p566 = pneg %p316
        %p567 = pneg %p313
        %s568 = sand.u32 %s303, 1
        %s569 = scalar_lea.sflag [#allocation4], %s568
        %s570 = sand.u32 %s303, 1
        %s571 = smul.addr %s570, 2
        %s572 = scalar_lea.vmem [#allocation8], %s571
        %p573 = pneg %p342
        %p574 = pneg %p339
        %s575 = sand.u32 %s329, 1
        %s576 = scalar_lea.sflag [#allocation10], %s575
        %s577 = sand.u32 %s329, 1
        %s578 = smul.addr %s577, 2
        %s579 = scalar_lea.vmem [#allocation9], %s578
        %p580 = pneg %p368
        %p581 = pneg %p365
        %p582 = scmp.lt.s32.totalorder %s38, 1
        %s583 = scalar_select %p582, %s38, 1
        %s584 = scalar_lea.vmem %s14, %s583
        %p585 = pneg %p394
        %p586 = pneg %p391
        %p587 = scmp.lt.s32.totalorder %s38, 1
        %s588 = scalar_select %p587, %s38, 1
        %s589 = scalar_lea.vmem %s15, %s588
        %p590 = pneg %p420
        %p591 = pneg %p417
        %p592 = scmp.lt.s32.totalorder %s38, 1
        %s593 = scalar_select %p592, %s38, 1
        %s594 = scalar_lea.vmem %s16, %s593
        %p595 = scmp.lt.s32.totalorder %s38, 1
        %s596 = scalar_select %p595, %s38, 1
        %s597 = scalar_lea.vmem %s14, %s596
        %p598 = scmp.lt.s32.totalorder %s38, 1
        %s599 = scalar_select %p598, %s38, 1
        %s600 = scalar_lea.vmem %s15, %s599
        %p601 = scmp.lt.s32.totalorder %s38, 1
        %s602 = scalar_select %p601, %s38, 1
        %s603 = scalar_lea.vmem %s16, %s602
        %v604 = vld [vmem:[%s524] sm:$0xff]
        %v605 = vld [vmem:[%s524 + $0x8] sm:$0xff]
        %v606 = vld [vmem:[%s524 + $0x10] sm:$0xff]
        %v607 = vld [vmem:[%s524 + $0x18] sm:$0xff]
        %v608 = vld [vmem:[%s524 + $0x20] sm:$0xff]
        %v609 = vld [vmem:[%s524 + $0x28] sm:$0xff]
        %v610 = vld [vmem:[%s1] sm:$0xff]
        %v611 = vld [vmem:[%s1 + $0x8] sm:$0xff]
        %v612 = vld [vmem:[%s1 + $0x10] sm:$0xff]
        %v613 = vld [vmem:[%s1 + $0x18] sm:$0xff]
        %v614 = vld [vmem:[%s1 + $0x20] sm:$0xff]
        %v615 = vld [vmem:[%s1 + $0x28] sm:$0xff]
        %v616 = vld [vmem:[%s1 + $0x30] sm:$0xff]
        %v617 = vld [vmem:[%s1 + $0x38] sm:$0xff]
        %v618 = vld [vmem:[%s1 + $0x40] sm:$0xff]
        %v619 = vld [vmem:[%s1 + $0x48] sm:$0xff]
        %v620 = vld [vmem:[%s1 + $0x50] sm:$0xff]
        %v621 = vld [vmem:[%s1 + $0x58] sm:$0xff]
        %v622 = vld [vmem:[%s1 + $0x60] sm:$0xff]
        %v623 = vld [vmem:[%s1 + $0x68] sm:$0xff]
        %v624 = vld [vmem:[%s1 + $0x70] sm:$0xff]
        %v625 = vld [vmem:[%s1 + $0x78] sm:$0xff]
        %v626 = vld [vmem:[%s2] sm:$0x1]
        %v628 = vlaneseq
        %v629 = vshrl.u32 %v628, 7
        %v630 = vsub.s32 0, %v629
        %v631 = vrot.slane %v626, %v630
        %633 = vmatprep.subr.mxu0 0.0
        %634 = vmatpush1.msra.mxu0 %v610
        %635 = vmatprep.subr.mxu0 0.0
        %636 = vmatpush1.msra.mxu0 %v611
        %637 = vmatprep.subr.mxu0 0.0
        %638 = vmatpush1.msra.mxu0 %v612
        %639 = vmatprep.subr.mxu0 0.0
        %640 = vmatpush1.msra.mxu0 %v613
        %641 = vmatprep.subr.mxu0 0.0
        %642 = vmatpush1.msra.mxu0 %v614
        %643 = vmatprep.subr.mxu0 0.0
        %644 = vmatpush1.msra.mxu0 %v615
        %645 = vmatprep.subr.mxu0 0.0
        %646 = vmatpush1.msra.mxu0 %v616
        %647 = vmatprep.subr.mxu0 0.0
        %648 = vmatpush1.msra.mxu0 %v617
        %649 = vmatprep.subr.mxu0 0.0
        %650 = vmatpush1.msra.mxu0 %v618
        %651 = vmatprep.subr.mxu0 0.0
        %652 = vmatpush1.msra.mxu0 %v619
        %653 = vmatprep.subr.mxu0 0.0
        %654 = vmatpush1.msra.mxu0 %v620
        %655 = vmatprep.subr.mxu0 0.0
        %656 = vmatpush1.msra.mxu0 %v621
        %657 = vmatprep.subr.mxu0 0.0
        %658 = vmatpush1.msra.mxu0 %v622
        %659 = vmatprep.subr.mxu0 0.0
        %660 = vmatpush1.msra.mxu0 %v623
        %661 = vmatprep.subr.mxu0 0.0
        %662 = vmatpush1.msra.mxu0 %v624
        %663 = vmatprep.subr.mxu0 0.0
        %664 = vmatpush1.msra.mxu0 %v625
        %665 = vmatprep.subr.mxu0 0.0
        %666 = vmatpush1.msra.mxu0 0.0
        %667 = vmatprep.subr.mxu0 0.0
        %668 = vmatpush1.msra.mxu0 0.0
        %669 = vmatprep.subr.mxu0 0.0
        %670 = vmatpush1.msra.mxu0 0.0
        %671 = vmatprep.subr.mxu0 0.0
        %672 = vmatpush1.msra.mxu0 0.0
        %673 = vmatprep.subr.mxu0 0.0
        %674 = vmatpush1.msra.mxu0 0.0
        %675 = vmatprep.subr.mxu0 0.0
        %676 = vmatpush1.msra.mxu0 0.0
        %677 = vmatprep.subr.mxu0 0.0
        %678 = vmatpush1.msra.mxu0 0.0
        %679 = vmatprep.subr.mxu0 0.0
        %680 = vmatpush1.msra.mxu0 0.0
        %681 = vmatprep.subr.mxu0 0.0
        %682 = vmatpush1.msra.mxu0 0.0
        %683 = vmatprep.subr.mxu0 0.0
        %684 = vmatpush1.msra.mxu0 0.0
        %685 = vmatprep.subr.mxu0 0.0
        %686 = vmatpush1.msra.mxu0 0.0
        %687 = vmatprep.subr.mxu0 0.0
        %688 = vmatpush1.msra.mxu0 0.0
        %689 = vmatprep.subr.mxu0 0.0
        %690 = vmatpush1.msra.mxu0 0.0
        %691 = vmatprep.subr.mxu0 0.0
        %692 = vmatpush1.msra.mxu0 0.0
        %693 = vmatprep.subr.mxu0 0.0
        %694 = vmatpush1.msra.mxu0 0.0
        %695 = vmatprep.subr.mxu0 0.0
        %696 = vmatpush1.msra.mxu0 0.0
        %697 = vmatprep.mubr.f32.mxu0 0.0
        %698 = vmatmul.mubr.f32.gmra.mrb[0].mxu0 %v604
        %v699 = vpop.f32.mrb[0].mxu0
        %v700 = vadd.f32 %v631, %v699
        %v701 = vpop.f32.mrb[0].mxu0
        %702 = vmatprep.mubr.f32.mxu0 0.0
        %703 = vmatmul.mubr.f32.gmra.mrb[0].mxu0 %v605
        %v704 = vpop.f32.mrb[0].mxu0
        %v705 = vadd.f32 %v631, %v704
        %v706 = vpop.f32.mrb[0].mxu0
        %707 = vmatprep.mubr.f32.mxu0 0.0
        %708 = vmatmul.mubr.f32.gmra.mrb[0].mxu0 %v606
        %v709 = vpop.f32.mrb[0].mxu0
        %v710 = vadd.f32 %v631, %v709
        %v711 = vpop.f32.mrb[0].mxu0
        %712 = vmatprep.mubr.f32.mxu0 0.0
        %713 = vmatmul.mubr.f32.gmra.mrb[0].mxu0 %v607
        %v714 = vpop.f32.mrb[0].mxu0
        %v715 = vadd.f32 %v631, %v714
        %v716 = vpop.f32.mrb[0].mxu0
        %717 = vmatprep.mubr.f32.mxu0 0.0
        %718 = vmatmul.mubr.f32.gmra.mrb[0].mxu0 %v608
        %v719 = vpop.f32.mrb[0].mxu0
        %v720 = vadd.f32 %v631, %v719
        %v721 = vpop.f32.mrb[0].mxu0
        %722 = vmatprep.mubr.f32.mxu0 0.0
        %723 = vmatmul.mubr.f32.gmra.mrb[0].mxu0 %v609
        %v724 = vpop.f32.mrb[0].mxu0
        %v725 = vadd.f32 %v631, %v724
        %v726 = vpop.f32.mrb[0].mxu0
        %727 = vdwg.mxu0
        %v728 = vtanh.pop %v700
        %v729 = vtanh.pop %v705
        %v730 = vtanh.pop %v710
        %v731 = vtanh.pop %v715
        %v732 = vtanh.pop %v720
        %v733 = vtanh.pop %v725
        %v734 = vld [vmem:[%s3] sm:$0x1]
        %735 = vmatprep.subr.mxu0 0.0
        %736 = vmatpush1.xpose.msra.mxu0 %v728
        %737 = vmatprep.subr.mxu0 0.0
        %738 = vmatpush1.xpose.msra.mxu0 %v729
        %739 = vmatprep.subr.mxu0 0.0
        %740 = vmatpush1.xpose.msra.mxu0 %v730
        %741 = vmatprep.subr.mxu0 0.0
        %742 = vmatpush1.xpose.msra.mxu0 %v731
        %743 = vmatprep.subr.mxu0 0.0
        %744 = vmatpush1.xpose.msra.mxu0 %v732
        %745 = vmatprep.subr.mxu0 0.0
        %746 = vmatpush1.xpose.msra.mxu0 %v733
        %747 = vmatprep.subr.mxu0 0.0
        %748 = vmatpush1.xpose.msra.mxu0 0.0
        %749 = vmatprep.subr.mxu0 0.0
        %750 = vmatpush1.xpose.msra.mxu0 0.0
        %751 = vmatprep.subr.mxu0 0.0
        %752 = vmatpush1.xpose.msra.mxu0 0.0
        %753 = vmatprep.subr.mxu0 0.0
        %754 = vmatpush1.xpose.msra.mxu0 0.0
        %755 = vmatprep.subr.mxu0 0.0
        %756 = vmatpush1.xpose.msra.mxu0 0.0
        %757 = vmatprep.subr.mxu0 0.0
        %758 = vmatpush1.xpose.msra.mxu0 0.0
        %759 = vmatprep.subr.mxu0 0.0
        %760 = vmatpush1.xpose.msra.mxu0 0.0
        %761 = vmatprep.subr.mxu0 0.0
        %762 = vmatpush1.xpose.msra.mxu0 0.0
        %763 = vmatprep.subr.mxu0 0.0
        %764 = vmatpush1.xpose.msra.mxu0 0.0
        %765 = vmatprep.subr.mxu0 0.0
        %766 = vmatpush1.xpose.msra.mxu0 0.0
        %767 = vmatprep.subr.mxu0 0.0
        %768 = vmatpush1.xpose.msra.mxu0 0.0
        %769 = vmatprep.subr.mxu0 0.0
        %770 = vmatpush1.xpose.msra.mxu0 0.0
        %771 = vmatprep.subr.mxu0 0.0
        %772 = vmatpush1.xpose.msra.mxu0 0.0
        %773 = vmatprep.subr.mxu0 0.0
        %774 = vmatpush1.xpose.msra.mxu0 0.0
        %775 = vmatprep.subr.mxu0 0.0
        %776 = vmatpush1.xpose.msra.mxu0 0.0
        %777 = vmatprep.subr.mxu0 0.0
        %778 = vmatpush1.xpose.msra.mxu0 0.0
        %779 = vmatprep.subr.mxu0 0.0
        %780 = vmatpush1.xpose.msra.mxu0 0.0
        %781 = vmatprep.subr.mxu0 0.0
        %782 = vmatpush1.xpose.msra.mxu0 0.0
        %783 = vmatprep.subr.mxu0 0.0
        %784 = vmatpush1.xpose.msra.mxu0 0.0
        %785 = vmatprep.subr.mxu0 0.0
        %786 = vmatpush1.xpose.msra.mxu0 0.0
        %787 = vmatprep.subr.mxu0 0.0
        %788 = vmatpush1.xpose.msra.mxu0 0.0
        %789 = vmatprep.subr.mxu0 0.0
        %790 = vmatpush1.xpose.msra.mxu0 0.0
        %791 = vmatprep.subr.mxu0 0.0
        %792 = vmatpush1.xpose.msra.mxu0 0.0
        %793 = vmatprep.subr.mxu0 0.0
        %794 = vmatpush1.xpose.msra.mxu0 0.0
        %795 = vmatprep.subr.mxu0 0.0
        %796 = vmatpush1.xpose.msra.mxu0 0.0
        %797 = vmatprep.subr.mxu0 0.0
        %798 = vmatpush1.xpose.msra.mxu0 0.0
        %799 = vmatprep.mubr.f32.mxu0 0.0
        %800 = vmatmul.mubr.f32.gmra.mrb[0].mxu0 %v734
        %v801 = vpop.f32.mrb[0].mxu0
        %v802 = vadd.f32 0.0, %v801
        %v803 = vpop.f32.mrb[0].mxu0
        %804 = vdwg.mxu0
        %vm805 = vcmask 385024
        %v806 = vsel %vm805, %v802, -inf
        %807 = vmax.xlane.f32.xlu0 %v806
        %v808 = vpop.xlane.xlu0 %807
        %v809 = vsub.f32 %v802, %v808
        %v810 = vmul.f32 %v809, 1.442695
        %v811 = vpow.pop %v810
        %v812 = vlaneseq
        %v813 = vshrl.u32 %v812, 7
        %v814 = vadd.s32 %v813, 8
        %v815 = vadd.s32 %v813, 16
        %v816 = vadd.s32 %v813, 24
        %v817 = vadd.s32 %v813, 32
        %v818 = vadd.s32 %v813, 40
        %v819 = vlaneseq
        %v820 = vand.u32 %v819, 127
        %v821 = vmul.u32 %v820, 4
        %vm822 = vcmp.ge.s32.totalorder %v813, %v821
        %vm823 = vcmp.ge.s32.totalorder %v814, %v821
        %vm824 = vcmp.ge.s32.totalorder %v815, %v821
        %vm825 = vcmp.ge.s32.totalorder %v816, %v821
        %vm826 = vcmp.ge.s32.totalorder %v817, %v821
        %vm827 = vcmp.ge.s32.totalorder %v818, %v821
        %v828 = vadd.s32 %v820, 1
        %v829 = vmul.u32 %v828, 4
        %vm830 = vcmp.lt.s32.totalorder %v813, %v829
        %vm831 = vcmp.lt.s32.totalorder %v814, %v829
        %vm832 = vcmp.lt.s32.totalorder %v815, %v829
        %vm833 = vcmp.lt.s32.totalorder %v816, %v829
        %vm834 = vcmp.lt.s32.totalorder %v817, %v829
        %vm835 = vcmp.lt.s32.totalorder %v818, %v829
        %vm836 = vmand %vm822, %vm830
        %vm837 = vmand %vm823, %vm831
        %vm838 = vmand %vm824, %vm832
        %vm839 = vmand %vm825, %vm833
        %vm840 = vmand %vm826, %vm834
        %vm841 = vmand %vm827, %vm835
        %v842 = vsel %vm836, 1, 0
        %v843 = vsel %vm837, 1, 0
        %v844 = vsel %vm838, 1, 0
        %v845 = vsel %vm839, 1, 0
        %v846 = vsel %vm840, 1, 0
        %v847 = vsel %vm841, 1, 0
        %v848 = vcvt.s32.f32 %v842
        %v849 = vcvt.s32.f32 %v843
        %v850 = vcvt.s32.f32 %v844
        %v851 = vcvt.s32.f32 %v845
        %v852 = vcvt.s32.f32 %v846
        %v853 = vcvt.s32.f32 %v847
        %v854 = vmul.u32 %v813, 4
        %v855 = vmul.u32 %v814, 4
        %vm856 = vcmp.ge.s32.totalorder %v820, %v854
        %vm857 = vcmp.ge.s32.totalorder %v820, %v855
        %v858 = vadd.s32 %v813, 1
        %v859 = vadd.s32 %v814, 1
        %v860 = vmul.u32 %v858, 4
        %v861 = vmul.u32 %v859, 4
        %vm862 = vcmp.lt.s32.totalorder %v820, %v860
        %vm863 = vcmp.lt.s32.totalorder %v820, %v861
        %vm864 = vmand %vm856, %vm862
        %vm865 = vmand %vm857, %vm863
        %v866 = vsel %vm864, 1, 0
        %v867 = vsel %vm865, 1, 0
        %v868 = vcvt.s32.f32 %v866
        %v869 = vcvt.s32.f32 %v867
        %vm870 = vcmask 392192
        %v872 = vsel %vm870, %v811, 0
        %874 = vmatprep.subr.mxu0 0.0
        %875 = vmatpush1.msra.mxu0 %v848
        %876 = vmatprep.subr.mxu0 0.0
        %877 = vmatpush1.msra.mxu0 %v849
        %878 = vmatprep.subr.mxu0 0.0
        %879 = vmatpush1.msra.mxu0 %v850
        %880 = vmatprep.subr.mxu0 0.0
        %881 = vmatpush1.msra.mxu0 %v851
        %882 = vmatprep.subr.mxu0 0.0
        %883 = vmatpush1.msra.mxu0 %v852
        %884 = vmatprep.subr.mxu0 0.0
        %885 = vmatpush1.msra.mxu0 %v853
        %886 = vmatprep.subr.mxu0 0.0
        %887 = vmatpush1.msra.mxu0 0.0
        %888 = vmatprep.subr.mxu0 0.0
        %889 = vmatpush1.msra.mxu0 0.0
        %890 = vmatprep.subr.mxu0 0.0
        %891 = vmatpush1.msra.mxu0 0.0
        %892 = vmatprep.subr.mxu0 0.0
        %893 = vmatpush1.msra.mxu0 0.0
        %894 = vmatprep.subr.mxu0 0.0
        %895 = vmatpush1.msra.mxu0 0.0
        %896 = vmatprep.subr.mxu0 0.0
        %897 = vmatpush1.msra.mxu0 0.0
        %898 = vmatprep.subr.mxu0 0.0
        %899 = vmatpush1.msra.mxu0 0.0
        %900 = vmatprep.subr.mxu0 0.0
        %901 = vmatpush1.msra.mxu0 0.0
        %902 = vmatprep.subr.mxu0 0.0
        %903 = vmatpush1.msra.mxu0 0.0
        %904 = vmatprep.subr.mxu0 0.0
        %905 = vmatpush1.msra.mxu0 0.0
        %906 = vmatprep.subr.mxu0 0.0
        %907 = vmatpush1.msra.mxu0 0.0
        %908 = vmatprep.subr.mxu0 0.0
        %909 = vmatpush1.msra.mxu0 0.0
        %910 = vmatprep.subr.mxu0 0.0
        %911 = vmatpush1.msra.mxu0 0.0
        %912 = vmatprep.subr.mxu0 0.0
        %913 = vmatpush1.msra.mxu0 0.0
        %914 = vmatprep.subr.mxu0 0.0
        %915 = vmatpush1.msra.mxu0 0.0
        %916 = vmatprep.subr.mxu0 0.0
        %917 = vmatpush1.msra.mxu0 0.0
        %918 = vmatprep.subr.mxu0 0.0
        %919 = vmatpush1.msra.mxu0 0.0
        %920 = vmatprep.subr.mxu0 0.0
        %921 = vmatpush1.msra.mxu0 0.0
        %922 = vmatprep.subr.mxu0 0.0
        %923 = vmatpush1.msra.mxu0 0.0
        %924 = vmatprep.subr.mxu0 0.0
        %925 = vmatpush1.msra.mxu0 0.0
        %926 = vmatprep.subr.mxu0 0.0
        %927 = vmatpush1.msra.mxu0 0.0
        %928 = vmatprep.subr.mxu0 0.0
        %929 = vmatpush1.msra.mxu0 0.0
        %930 = vmatprep.subr.mxu0 0.0
        %931 = vmatpush1.msra.mxu0 0.0
        %932 = vmatprep.subr.mxu0 0.0
        %933 = vmatpush1.msra.mxu0 0.0
        %934 = vmatprep.subr.mxu0 0.0
        %935 = vmatpush1.msra.mxu0 0.0
        %936 = vmatprep.subr.mxu0 0.0
        %937 = vmatpush1.msra.mxu0 0.0
        %938 = vmatprep.mubr.f32.mxu0 0.0
        %939 = vmatmul.mubr.f32.gmra.mrb[0].mxu0 %v872
        %v940 = vpop.f32.mrb[0].mxu0
        %v941 = vadd.f32 0.0, %v940
        %v942 = vpop.f32.mrb[0].mxu0
        %943 = vdwg.mxu0
        %vm944 = vcmask 97280
        %v946 = vsel %vm944, %v941, 0
        %vm948 = vcmask 1043456
        %v950 = vsel %vm948, %v869, 0
        %952 = vmatprep.subr.mxu0 0.0
        %953 = vmatpush1.msra.mxu0 %v868
        %954 = vmatprep.subr.mxu0 0.0
        %955 = vmatpush1.msra.mxu0 %v950
        %956 = vmatprep.subr.mxu0 0.0
        %957 = vmatpush1.msra.mxu0 0.0
        %958 = vmatprep.subr.mxu0 0.0
        %959 = vmatpush1.msra.mxu0 0.0
        %960 = vmatprep.subr.mxu0 0.0
        %961 = vmatpush1.msra.mxu0 0.0
        %962 = vmatprep.subr.mxu0 0.0
        %963 = vmatpush1.msra.mxu0 0.0
        %964 = vmatprep.subr.mxu0 0.0
        %965 = vmatpush1.msra.mxu0 0.0
        %966 = vmatprep.subr.mxu0 0.0
        %967 = vmatpush1.msra.mxu0 0.0
        %968 = vmatprep.subr.mxu0 0.0
        %969 = vmatpush1.msra.mxu0 0.0
        %970 = vmatprep.subr.mxu0 0.0
        %971 = vmatpush1.msra.mxu0 0.0
        %972 = vmatprep.subr.mxu0 0.0
        %973 = vmatpush1.msra.mxu0 0.0
        %974 = vmatprep.subr.mxu0 0.0
        %975 = vmatpush1.msra.mxu0 0.0
        %976 = vmatprep.subr.mxu0 0.0
        %977 = vmatpush1.msra.mxu0 0.0
        %978 = vmatprep.subr.mxu0 0.0
        %979 = vmatpush1.msra.mxu0 0.0
        %980 = vmatprep.subr.mxu0 0.0
        %981 = vmatpush1.msra.mxu0 0.0
        %982 = vmatprep.subr.mxu0 0.0
        %983 = vmatpush1.msra.mxu0 0.0
        %984 = vmatprep.subr.mxu0 0.0
        %985 = vmatpush1.msra.mxu0 0.0
        %986 = vmatprep.subr.mxu0 0.0
        %987 = vmatpush1.msra.mxu0 0.0
        %988 = vmatprep.subr.mxu0 0.0
        %989 = vmatpush1.msra.mxu0 0.0
        %990 = vmatprep.subr.mxu0 0.0
        %991 = vmatpush1.msra.mxu0 0.0
        %992 = vmatprep.subr.mxu0 0.0
        %993 = vmatpush1.msra.mxu0 0.0
        %994 = vmatprep.subr.mxu0 0.0
        %995 = vmatpush1.msra.mxu0 0.0
        %996 = vmatprep.subr.mxu0 0.0
        %997 = vmatpush1.msra.mxu0 0.0
        %998 = vmatprep.subr.mxu0 0.0
        %999 = vmatpush1.msra.mxu0 0.0
        %1000 = vmatprep.subr.mxu0 0.0
        %1001 = vmatpush1.msra.mxu0 0.0
        %1002 = vmatprep.subr.mxu0 0.0
        %1003 = vmatpush1.msra.mxu0 0.0
        %1004 = vmatprep.subr.mxu0 0.0
        %1005 = vmatpush1.msra.mxu0 0.0
        %1006 = vmatprep.subr.mxu0 0.0
        %1007 = vmatpush1.msra.mxu0 0.0
        %1008 = vmatprep.subr.mxu0 0.0
        %1009 = vmatpush1.msra.mxu0 0.0
        %1010 = vmatprep.subr.mxu0 0.0
        %1011 = vmatpush1.msra.mxu0 0.0
        %1012 = vmatprep.subr.mxu0 0.0
        %1013 = vmatpush1.msra.mxu0 0.0
        %1014 = vmatprep.subr.mxu0 0.0
        %1015 = vmatpush1.msra.mxu0 0.0
        %1016 = vmatprep.mubr.f32.mxu0 0.0
        %1017 = vmatmul.mubr.f32.gmra.mrb[0].mxu0 %v946
        %v1018 = vpop.f32.mrb[0].mxu0
        %v1019 = vadd.f32 0.0, %v1018
        %v1020 = vpop.f32.mrb[0].mxu0
        %1021 = vdwg.mxu0
        %v1022 = vrcp.pop %v1019
        %v1023 = vmul.f32 %v811, %v1022
        %v1024 = vlaneseq
        %v1025 = vshrl.u32 %v1024, 7
        %v1026 = vsub.s32 0, %v1025
        %v1027 = vrot.slane %v1023, %v1026
        %v1028 = vmul.f32 %v868, %v1027
        %v1029 = vmul.f32 %v869, %v1027
        %v1031 = vsel %vm870, %v1028, 0
        %v1034 = vsel %vm870, %v1029, 0
        %1036 = vmatprep.subr.mxu0 0.0
        %1037 = vmatpush1.msra.mxu0 %v604
        %1038 = vmatprep.subr.mxu0 0.0
        %1039 = vmatpush1.msra.mxu0 %v605
        %1040 = vmatprep.subr.mxu0 0.0
        %1041 = vmatpush1.msra.mxu0 %v606
        %1042 = vmatprep.subr.mxu0 0.0
        %1043 = vmatpush1.msra.mxu0 %v607
        %1044 = vmatprep.subr.mxu0 0.0
        %1045 = vmatpush1.msra.mxu0 %v608
        %1046 = vmatprep.subr.mxu0 0.0
        %1047 = vmatpush1.msra.mxu0 %v609
        %1048 = vmatprep.subr.mxu0 0.0
        %1049 = vmatpush1.msra.mxu0 0.0
        %1050 = vmatprep.subr.mxu0 0.0
        %1051 = vmatpush1.msra.mxu0 0.0
        %1052 = vmatprep.subr.mxu0 0.0
        %1053 = vmatpush1.msra.mxu0 0.0
        %1054 = vmatprep.subr.mxu0 0.0
        %1055 = vmatpush1.msra.mxu0 0.0
        %1056 = vmatprep.subr.mxu0 0.0
        %1057 = vmatpush1.msra.mxu0 0.0
        %1058 = vmatprep.subr.mxu0 0.0
        %1059 = vmatpush1.msra.mxu0 0.0
        %1060 = vmatprep.subr.mxu0 0.0
        %1061 = vmatpush1.msra.mxu0 0.0
        %1062 = vmatprep.subr.mxu0 0.0
        %1063 = vmatpush1.msra.mxu0 0.0
        %1064 = vmatprep.subr.mxu0 0.0
        %1065 = vmatpush1.msra.mxu0 0.0
        %1066 = vmatprep.subr.mxu0 0.0
        %1067 = vmatpush1.msra.mxu0 0.0
        %1068 = vmatprep.subr.mxu0 0.0
        %1069 = vmatpush1.msra.mxu0 0.0
        %1070 = vmatprep.subr.mxu0 0.0
        %1071 = vmatpush1.msra.mxu0 0.0
        %1072 = vmatprep.subr.mxu0 0.0
        %1073 = vmatpush1.msra.mxu0 0.0
        %1074 = vmatprep.subr.mxu0 0.0
        %1075 = vmatpush1.msra.mxu0 0.0
        %1076 = vmatprep.subr.mxu0 0.0
        %1077 = vmatpush1.msra.mxu0 0.0
        %1078 = vmatprep.subr.mxu0 0.0
        %1079 = vmatpush1.msra.mxu0 0.0
        %1080 = vmatprep.subr.mxu0 0.0
        %1081 = vmatpush1.msra.mxu0 0.0
        %1082 = vmatprep.subr.mxu0 0.0
        %1083 = vmatpush1.msra.mxu0 0.0
        %1084 = vmatprep.subr.mxu0 0.0
        %1085 = vmatpush1.msra.mxu0 0.0
        %1086 = vmatprep.subr.mxu0 0.0
        %1087 = vmatpush1.msra.mxu0 0.0
        %1088 = vmatprep.subr.mxu0 0.0
        %1089 = vmatpush1.msra.mxu0 0.0
        %1090 = vmatprep.subr.mxu0 0.0
        %1091 = vmatpush1.msra.mxu0 0.0
        %1092 = vmatprep.subr.mxu0 0.0
        %1093 = vmatpush1.msra.mxu0 0.0
        %1094 = vmatprep.subr.mxu0 0.0
        %1095 = vmatpush1.msra.mxu0 0.0
        %1096 = vmatprep.subr.mxu0 0.0
        %1097 = vmatpush1.msra.mxu0 0.0
        %1098 = vmatprep.subr.mxu0 0.0
        %1099 = vmatpush1.msra.mxu0 0.0
        %1100 = vmatprep.mubr.f32.mxu0 0.0
        %1101 = vmatmul.mubr.f32.gmra.mrb[0].mxu0 %v1031
        %v1102 = vpop.f32.mrb[0].mxu0
        %v1103 = vadd.f32 0.0, %v1102
        %v1104 = vpop.f32.mrb[0].mxu0
        %1105 = vmatprep.mubr.f32.mxu0 0.0
        %1106 = vmatmul.mubr.f32.gmra.mrb[0].mxu0 %v1034
        %v1107 = vpop.f32.mrb[0].mxu0
        %v1108 = vadd.f32 0.0, %v1107
        %v1109 = vpop.f32.mrb[0].mxu0
        %1110 = vdwg.mxu0
        %1111 = vst.msk [vmem:[%s597] sm:$0x1] %vm805, %v1023
        %v1112 = vld [vmem:[#allocation5] sm:$0xff]
        %v1113 = vld [vmem:[#allocation5 + $0x8] sm:$0xff]
        %v1114 = vld [vmem:[#allocation5 + $0x10] sm:$0xff]
        %v1115 = vld [vmem:[#allocation5 + $0x18] sm:$0xff]
        %v1116 = vld [vmem:[#allocation5 + $0x20] sm:$0xff]
        %v1117 = vld [vmem:[#allocation5 + $0x28] sm:$0xff]
        %v1118 = vld [vmem:[#allocation5 + $0x30] sm:$0xff]
        %v1119 = vld [vmem:[#allocation5 + $0x38] sm:$0xff]
        %v1120 = vld [vmem:[#allocation5 + $0x40] sm:$0xff]
        %v1121 = vld [vmem:[#allocation5 + $0x48] sm:$0xff]
        %v1122 = vld [vmem:[#allocation5 + $0x50] sm:$0xff]
        %v1123 = vld [vmem:[#allocation5 + $0x58] sm:$0xff]
        %v1124 = vld [vmem:[#allocation5 + $0x60] sm:$0xff]
        %v1125 = vld [vmem:[#allocation5 + $0x68] sm:$0xff]
        %v1126 = vld [vmem:[#allocation5 + $0x70] sm:$0xff]
        %v1127 = vld [vmem:[#allocation5 + $0x78] sm:$0xff]
        %v1128 = vld [vmem:[%s5] sm:$0x1]
        %v1130 = vlaneseq
        %v1131 = vshrl.u32 %v1130, 7
        %v1132 = vsub.s32 0, %v1131
        %v1133 = vrot.slane %v1128, %v1132
        %1135 = vmatprep.subr.mxu0 0.0
        %1136 = vmatpush1.msra.mxu0 %v1112
        %1137 = vmatprep.subr.mxu0 0.0
        %1138 = vmatpush1.msra.mxu0 %v1113
        %1139 = vmatprep.subr.mxu0 0.0
        %1140 = vmatpush1.msra.mxu0 %v1114
        %1141 = vmatprep.subr.mxu0 0.0
        %1142 = vmatpush1.msra.mxu0 %v1115
        %1143 = vmatprep.subr.mxu0 0.0
        %1144 = vmatpush1.msra.mxu0 %v1116
        %1145 = vmatprep.subr.mxu0 0.0
        %1146 = vmatpush1.msra.mxu0 %v1117
        %1147 = vmatprep.subr.mxu0 0.0
        %1148 = vmatpush1.msra.mxu0 %v1118
        %1149 = vmatprep.subr.mxu0 0.0
        %1150 = vmatpush1.msra.mxu0 %v1119
        %1151 = vmatprep.subr.mxu0 0.0
        %1152 = vmatpush1.msra.mxu0 %v1120
        %1153 = vmatprep.subr.mxu0 0.0
        %1154 = vmatpush1.msra.mxu0 %v1121
        %1155 = vmatprep.subr.mxu0 0.0
        %1156 = vmatpush1.msra.mxu0 %v1122
        %1157 = vmatprep.subr.mxu0 0.0
        %1158 = vmatpush1.msra.mxu0 %v1123
        %1159 = vmatprep.subr.mxu0 0.0
        %1160 = vmatpush1.msra.mxu0 %v1124
        %1161 = vmatprep.subr.mxu0 0.0
        %1162 = vmatpush1.msra.mxu0 %v1125
        %1163 = vmatprep.subr.mxu0 0.0
        %1164 = vmatpush1.msra.mxu0 %v1126
        %1165 = vmatprep.subr.mxu0 0.0
        %1166 = vmatpush1.msra.mxu0 %v1127
        %1167 = vmatprep.subr.mxu0 0.0
        %1168 = vmatpush1.msra.mxu0 0.0
        %1169 = vmatprep.subr.mxu0 0.0
        %1170 = vmatpush1.msra.mxu0 0.0
        %1171 = vmatprep.subr.mxu0 0.0
        %1172 = vmatpush1.msra.mxu0 0.0
        %1173 = vmatprep.subr.mxu0 0.0
        %1174 = vmatpush1.msra.mxu0 0.0
        %1175 = vmatprep.subr.mxu0 0.0
        %1176 = vmatpush1.msra.mxu0 0.0
        %1177 = vmatprep.subr.mxu0 0.0
        %1178 = vmatpush1.msra.mxu0 0.0
        %1179 = vmatprep.subr.mxu0 0.0
        %1180 = vmatpush1.msra.mxu0 0.0
        %1181 = vmatprep.subr.mxu0 0.0
        %1182 = vmatpush1.msra.mxu0 0.0
        %1183 = vmatprep.subr.mxu0 0.0
        %1184 = vmatpush1.msra.mxu0 0.0
        %1185 = vmatprep.subr.mxu0 0.0
        %1186 = vmatpush1.msra.mxu0 0.0
        %1187 = vmatprep.subr.mxu0 0.0
        %1188 = vmatpush1.msra.mxu0 0.0
        %1189 = vmatprep.subr.mxu0 0.0
        %1190 = vmatpush1.msra.mxu0 0.0
        %1191 = vmatprep.subr.mxu0 0.0
        %1192 = vmatpush1.msra.mxu0 0.0
        %1193 = vmatprep.subr.mxu0 0.0
        %1194 = vmatpush1.msra.mxu0 0.0
        %1195 = vmatprep.subr.mxu0 0.0
        %1196 = vmatpush1.msra.mxu0 0.0
        %1197 = vmatprep.subr.mxu0 0.0
        %1198 = vmatpush1.msra.mxu0 0.0
        %1199 = vmatprep.mubr.f32.mxu0 0.0
        %1200 = vmatmul.mubr.f32.gmra.mrb[0].mxu0 %v1103
        %v1201 = vpop.f32.mrb[0].mxu0
        %v1202 = vadd.f32 %v1133, %v1201
        %v1203 = vpop.f32.mrb[0].mxu0
        %1204 = vmatprep.mubr.f32.mxu0 0.0
        %1205 = vmatmul.mubr.f32.gmra.mrb[0].mxu0 %v1108
        %v1206 = vpop.f32.mrb[0].mxu0
        %v1207 = vadd.f32 %v1133, %v1206
        %v1208 = vpop.f32.mrb[0].mxu0
        %1209 = vdwg.mxu0
        %v1210 = vtanh.pop %v1202
        %v1211 = vtanh.pop %v1207
        %v1212 = vld [vmem:[%s6] sm:$0x1]
        %1213 = vmatprep.subr.mxu0 0.0
        %1214 = vmatpush1.xpose.msra.mxu0 %v1210
        %1215 = vmatprep.subr.mxu0 0.0
        %1216 = vmatpush1.xpose.msra.mxu0 %v1211
        %1217 = vmatprep.subr.mxu0 0.0
        %1218 = vmatpush1.xpose.msra.mxu0 0.0
        %1219 = vmatprep.subr.mxu0 0.0
        %1220 = vmatpush1.xpose.msra.mxu0 0.0
        %1221 = vmatprep.subr.mxu0 0.0
        %1222 = vmatpush1.xpose.msra.mxu0 0.0
        %1223 = vmatprep.subr.mxu0 0.0
        %1224 = vmatpush1.xpose.msra.mxu0 0.0
        %1225 = vmatprep.subr.mxu0 0.0
        %1226 = vmatpush1.xpose.msra.mxu0 0.0
        %1227 = vmatprep.subr.mxu0 0.0
        %1228 = vmatpush1.xpose.msra.mxu0 0.0
        %1229 = vmatprep.subr.mxu0 0.0
        %1230 = vmatpush1.xpose.msra.mxu0 0.0
        %1231 = vmatprep.subr.mxu0 0.0
        %1232 = vmatpush1.xpose.msra.mxu0 0.0
        %1233 = vmatprep.subr.mxu0 0.0
        %1234 = vmatpush1.xpose.msra.mxu0 0.0
        %1235 = vmatprep.subr.mxu0 0.0
        %1236 = vmatpush1.xpose.msra.mxu0 0.0
        %1237 = vmatprep.subr.mxu0 0.0
        %1238 = vmatpush1.xpose.msra.mxu0 0.0
        %1239 = vmatprep.subr.mxu0 0.0
        %1240 = vmatpush1.xpose.msra.mxu0 0.0
        %1241 = vmatprep.subr.mxu0 0.0
        %1242 = vmatpush1.xpose.msra.mxu0 0.0
        %1243 = vmatprep.subr.mxu0 0.0
        %1244 = vmatpush1.xpose.msra.mxu0 0.0
        %1245 = vmatprep.subr.mxu0 0.0
        %1246 = vmatpush1.xpose.msra.mxu0 0.0
        %1247 = vmatprep.subr.mxu0 0.0
        %1248 = vmatpush1.xpose.msra.mxu0 0.0
        %1249 = vmatprep.subr.mxu0 0.0
        %1250 = vmatpush1.xpose.msra.mxu0 0.0
        %1251 = vmatprep.subr.mxu0 0.0
        %1252 = vmatpush1.xpose.msra.mxu0 0.0
        %1253 = vmatprep.subr.mxu0 0.0
        %1254 = vmatpush1.xpose.msra.mxu0 0.0
        %1255 = vmatprep.subr.mxu0 0.0
        %1256 = vmatpush1.xpose.msra.mxu0 0.0
        %1257 = vmatprep.subr.mxu0 0.0
        %1258 = vmatpush1.xpose.msra.mxu0 0.0
        %1259 = vmatprep.subr.mxu0 0.0
        %1260 = vmatpush1.xpose.msra.mxu0 0.0
        %1261 = vmatprep.subr.mxu0 0.0
        %1262 = vmatpush1.xpose.msra.mxu0 0.0
        %1263 = vmatprep.subr.mxu0 0.0
        %1264 = vmatpush1.xpose.msra.mxu0 0.0
        %1265 = vmatprep.subr.mxu0 0.0
        %1266 = vmatpush1.xpose.msra.mxu0 0.0
        %1267 = vmatprep.subr.mxu0 0.0
        %1268 = vmatpush1.xpose.msra.mxu0 0.0
        %1269 = vmatprep.subr.mxu0 0.0
        %1270 = vmatpush1.xpose.msra.mxu0 0.0
        %1271 = vmatprep.subr.mxu0 0.0
        %1272 = vmatpush1.xpose.msra.mxu0 0.0
        %1273 = vmatprep.subr.mxu0 0.0
        %1274 = vmatpush1.xpose.msra.mxu0 0.0
        %1275 = vmatprep.subr.mxu0 0.0
        %1276 = vmatpush1.xpose.msra.mxu0 0.0
        %1277 = vmatprep.mubr.f32.mxu0 0.0
        %1278 = vmatmul.mubr.f32.gmra.mrb[0].mxu0 %v1212
        %v1279 = vpop.f32.mrb[0].mxu0
        %v1280 = vadd.f32 0.0, %v1279
        %v1281 = vpop.f32.mrb[0].mxu0
        %1282 = vdwg.mxu0
        %vm1283 = vcmask 90112
        %v1284 = vsel %vm1283, %v1280, -inf
        %1285 = vmax.xlane.f32.xlu0 %v1284
        %v1286 = vpop.xlane.xlu0 %1285
        %v1287 = vsub.f32 %v1280, %v1286
        %v1288 = vmul.f32 %v1287, 1.442695
        %v1289 = vpow.pop %v1288
        %v1290 = vmul.u32 %v820, 3
        %vm1291 = vcmp.ge.s32.totalorder %v813, %v1290
        %vm1292 = vcmp.ge.s32.totalorder %v814, %v1290
        %v1293 = vmul.u32 %v828, 3
        %vm1294 = vcmp.lt.s32.totalorder %v813, %v1293
        %vm1295 = vcmp.lt.s32.totalorder %v814, %v1293
        %vm1296 = vmand %vm1291, %vm1294
        %vm1297 = vmand %vm1292, %vm1295
        %v1298 = vsel %vm1296, 1, 0
        %v1299 = vsel %vm1297, 1, 0
        %v1300 = vcvt.s32.f32 %v1298
        %v1301 = vcvt.s32.f32 %v1299
        %v1302 = vmul.u32 %v813, 3
        %vm1303 = vcmp.ge.s32.totalorder %v820, %v1302
        %v1304 = vmul.u32 %v858, 3
        %vm1305 = vcmp.lt.s32.totalorder %v820, %v1304
        %vm1306 = vmand %vm1303, %vm1305
        %v1307 = vsel %vm1306, 1, 0
        %v1308 = vcvt.s32.f32 %v1307
        %v1310 = vsel %vm944, %v1289, 0
        %v1313 = vsel %vm948, %v1301, 0
        %1315 = vmatprep.subr.mxu0 0.0
        %1316 = vmatpush1.msra.mxu0 %v1300
        %1317 = vmatprep.subr.mxu0 0.0
        %1318 = vmatpush1.msra.mxu0 %v1313
        %1319 = vmatprep.subr.mxu0 0.0
        %1320 = vmatpush1.msra.mxu0 0.0
        %1321 = vmatprep.subr.mxu0 0.0
        %1322 = vmatpush1.msra.mxu0 0.0
        %1323 = vmatprep.subr.mxu0 0.0
        %1324 = vmatpush1.msra.mxu0 0.0
        %1325 = vmatprep.subr.mxu0 0.0
        %1326 = vmatpush1.msra.mxu0 0.0
        %1327 = vmatprep.subr.mxu0 0.0
        %1328 = vmatpush1.msra.mxu0 0.0
        %1329 = vmatprep.subr.mxu0 0.0
        %1330 = vmatpush1.msra.mxu0 0.0
        %1331 = vmatprep.subr.mxu0 0.0
        %1332 = vmatpush1.msra.mxu0 0.0
        %1333 = vmatprep.subr.mxu0 0.0
        %1334 = vmatpush1.msra.mxu0 0.0
        %1335 = vmatprep.subr.mxu0 0.0
        %1336 = vmatpush1.msra.mxu0 0.0
        %1337 = vmatprep.subr.mxu0 0.0
        %1338 = vmatpush1.msra.mxu0 0.0
        %1339 = vmatprep.subr.mxu0 0.0
        %1340 = vmatpush1.msra.mxu0 0.0
        %1341 = vmatprep.subr.mxu0 0.0
        %1342 = vmatpush1.msra.mxu0 0.0
        %1343 = vmatprep.subr.mxu0 0.0
        %1344 = vmatpush1.msra.mxu0 0.0
        %1345 = vmatprep.subr.mxu0 0.0
        %1346 = vmatpush1.msra.mxu0 0.0
        %1347 = vmatprep.subr.mxu0 0.0
        %1348 = vmatpush1.msra.mxu0 0.0
        %1349 = vmatprep.subr.mxu0 0.0
        %1350 = vmatpush1.msra.mxu0 0.0
        %1351 = vmatprep.subr.mxu0 0.0
        %1352 = vmatpush1.msra.mxu0 0.0
        %1353 = vmatprep.subr.mxu0 0.0
        %1354 = vmatpush1.msra.mxu0 0.0
        %1355 = vmatprep.subr.mxu0 0.0
        %1356 = vmatpush1.msra.mxu0 0.0
        %1357 = vmatprep.subr.mxu0 0.0
        %1358 = vmatpush1.msra.mxu0 0.0
        %1359 = vmatprep.subr.mxu0 0.0
        %1360 = vmatpush1.msra.mxu0 0.0
        %1361 = vmatprep.subr.mxu0 0.0
        %1362 = vmatpush1.msra.mxu0 0.0
        %1363 = vmatprep.subr.mxu0 0.0
        %1364 = vmatpush1.msra.mxu0 0.0
        %1365 = vmatprep.subr.mxu0 0.0
        %1366 = vmatpush1.msra.mxu0 0.0
        %1367 = vmatprep.subr.mxu0 0.0
        %1368 = vmatpush1.msra.mxu0 0.0
        %1369 = vmatprep.subr.mxu0 0.0
        %1370 = vmatpush1.msra.mxu0 0.0
        %1371 = vmatprep.subr.mxu0 0.0
        %1372 = vmatpush1.msra.mxu0 0.0
        %1373 = vmatprep.subr.mxu0 0.0
        %1374 = vmatpush1.msra.mxu0 0.0
        %1375 = vmatprep.subr.mxu0 0.0
        %1376 = vmatpush1.msra.mxu0 0.0
        %1377 = vmatprep.subr.mxu0 0.0
        %1378 = vmatpush1.msra.mxu0 0.0
        %1379 = vmatprep.mubr.f32.mxu0 0.0
        %1380 = vmatmul.mubr.f32.gmra.mrb[0].mxu0 %v1310
        %v1381 = vpop.f32.mrb[0].mxu0
        %v1382 = vadd.f32 0.0, %v1381
        %v1383 = vpop.f32.mrb[0].mxu0
        %1384 = vdwg.mxu0
        %vm1385 = vcmask 31744
        %v1387 = vsel %vm1385, %v1382, 0
        %v1390 = vsel %vm948, %v1308, 0
        %1392 = vmatprep.subr.mxu0 0.0
        %1393 = vmatpush1.msra.mxu0 %v1390
        %1394 = vmatprep.subr.mxu0 0.0
        %1395 = vmatpush1.msra.mxu0 0.0
        %1396 = vmatprep.subr.mxu0 0.0
        %1397 = vmatpush1.msra.mxu0 0.0
        %1398 = vmatprep.subr.mxu0 0.0
        %1399 = vmatpush1.msra.mxu0 0.0
        %1400 = vmatprep.subr.mxu0 0.0
        %1401 = vmatpush1.msra.mxu0 0.0
        %1402 = vmatprep.subr.mxu0 0.0
        %1403 = vmatpush1.msra.mxu0 0.0
        %1404 = vmatprep.subr.mxu0 0.0
        %1405 = vmatpush1.msra.mxu0 0.0
        %1406 = vmatprep.subr.mxu0 0.0
        %1407 = vmatpush1.msra.mxu0 0.0
        %1408 = vmatprep.subr.mxu0 0.0
        %1409 = vmatpush1.msra.mxu0 0.0
        %1410 = vmatprep.subr.mxu0 0.0
        %1411 = vmatpush1.msra.mxu0 0.0
        %1412 = vmatprep.subr.mxu0 0.0
        %1413 = vmatpush1.msra.mxu0 0.0
        %1414 = vmatprep.subr.mxu0 0.0
        %1415 = vmatpush1.msra.mxu0 0.0
        %1416 = vmatprep.subr.mxu0 0.0
        %1417 = vmatpush1.msra.mxu0 0.0
        %1418 = vmatprep.subr.mxu0 0.0
        %1419 = vmatpush1.msra.mxu0 0.0
        %1420 = vmatprep.subr.mxu0 0.0
        %1421 = vmatpush1.msra.mxu0 0.0
        %1422 = vmatprep.subr.mxu0 0.0
        %1423 = vmatpush1.msra.mxu0 0.0
        %1424 = vmatprep.subr.mxu0 0.0
        %1425 = vmatpush1.msra.mxu0 0.0
        %1426 = vmatprep.subr.mxu0 0.0
        %1427 = vmatpush1.msra.mxu0 0.0
        %1428 = vmatprep.subr.mxu0 0.0
        %1429 = vmatpush1.msra.mxu0 0.0
        %1430 = vmatprep.subr.mxu0 0.0
        %1431 = vmatpush1.msra.mxu0 0.0
        %1432 = vmatprep.subr.mxu0 0.0
        %1433 = vmatpush1.msra.mxu0 0.0
        %1434 = vmatprep.subr.mxu0 0.0
        %1435 = vmatpush1.msra.mxu0 0.0
        %1436 = vmatprep.subr.mxu0 0.0
        %1437 = vmatpush1.msra.mxu0 0.0
        %1438 = vmatprep.subr.mxu0 0.0
        %1439 = vmatpush1.msra.mxu0 0.0
        %1440 = vmatprep.subr.mxu0 0.0
        %1441 = vmatpush1.msra.mxu0 0.0
        %1442 = vmatprep.subr.mxu0 0.0
        %1443 = vmatpush1.msra.mxu0 0.0
        %1444 = vmatprep.subr.mxu0 0.0
        %1445 = vmatpush1.msra.mxu0 0.0
        %1446 = vmatprep.subr.mxu0 0.0
        %1447 = vmatpush1.msra.mxu0 0.0
        %1448 = vmatprep.subr.mxu0 0.0
        %1449 = vmatpush1.msra.mxu0 0.0
        %1450 = vmatprep.subr.mxu0 0.0
        %1451 = vmatpush1.msra.mxu0 0.0
        %1452 = vmatprep.subr.mxu0 0.0
        %1453 = vmatpush1.msra.mxu0 0.0
        %1454 = vmatprep.subr.mxu0 0.0
        %1455 = vmatpush1.msra.mxu0 0.0
        %1456 = vmatprep.mubr.f32.mxu0 0.0
        %1457 = vmatmul.mubr.f32.gmra.mrb[0].mxu0 %v1387
        %v1458 = vpop.f32.mrb[0].mxu0
        %v1459 = vadd.f32 0.0, %v1458
        %v1460 = vpop.f32.mrb[0].mxu0
        %1461 = vdwg.mxu0
        %v1462 = vrcp.pop %v1459
        %v1463 = vmul.f32 %v1289, %v1462
        %v1464 = vlaneseq
        %v1465 = vshrl.u32 %v1464, 7
        %v1466 = vsub.s32 0, %v1465
        %v1467 = vrot.slane %v1463, %v1466
        %v1468 = vmul.f32 %v1308, %v1467
        %v1470 = vsel %vm944, %v1468, 0
        %v1473 = vsel %vm948, %v1108, 0
        %1475 = vmatprep.subr.mxu0 0.0
        %1476 = vmatpush1.msra.mxu0 %v1103
        %1477 = vmatprep.subr.mxu0 0.0
        %1478 = vmatpush1.msra.mxu0 %v1473
        %1479 = vmatprep.subr.mxu0 0.0
        %1480 = vmatpush1.msra.mxu0 0.0
        %1481 = vmatprep.subr.mxu0 0.0
        %1482 = vmatpush1.msra.mxu0 0.0
        %1483 = vmatprep.subr.mxu0 0.0
        %1484 = vmatpush1.msra.mxu0 0.0
        %1485 = vmatprep.subr.mxu0 0.0
        %1486 = vmatpush1.msra.mxu0 0.0
        %1487 = vmatprep.subr.mxu0 0.0
        %1488 = vmatpush1.msra.mxu0 0.0
        %1489 = vmatprep.subr.mxu0 0.0
        %1490 = vmatpush1.msra.mxu0 0.0
        %1491 = vmatprep.subr.mxu0 0.0
        %1492 = vmatpush1.msra.mxu0 0.0
        %1493 = vmatprep.subr.mxu0 0.0
        %1494 = vmatpush1.msra.mxu0 0.0
        %1495 = vmatprep.subr.mxu0 0.0
        %1496 = vmatpush1.msra.mxu0 0.0
        %1497 = vmatprep.subr.mxu0 0.0
        %1498 = vmatpush1.msra.mxu0 0.0
        %1499 = vmatprep.subr.mxu0 0.0
        %1500 = vmatpush1.msra.mxu0 0.0
        %1501 = vmatprep.subr.mxu0 0.0
        %1502 = vmatpush1.msra.mxu0 0.0
        %1503 = vmatprep.subr.mxu0 0.0
        %1504 = vmatpush1.msra.mxu0 0.0
        %1505 = vmatprep.subr.mxu0 0.0
        %1506 = vmatpush1.msra.mxu0 0.0
        %1507 = vmatprep.subr.mxu0 0.0
        %1508 = vmatpush1.msra.mxu0 0.0
        %1509 = vmatprep.subr.mxu0 0.0
        %1510 = vmatpush1.msra.mxu0 0.0
        %1511 = vmatprep.subr.mxu0 0.0
        %1512 = vmatpush1.msra.mxu0 0.0
        %1513 = vmatprep.subr.mxu0 0.0
        %1514 = vmatpush1.msra.mxu0 0.0
        %1515 = vmatprep.subr.mxu0 0.0
        %1516 = vmatpush1.msra.mxu0 0.0
        %1517 = vmatprep.subr.mxu0 0.0
        %1518 = vmatpush1.msra.mxu0 0.0
        %1519 = vmatprep.subr.mxu0 0.0
        %1520 = vmatpush1.msra.mxu0 0.0
        %1521 = vmatprep.subr.mxu0 0.0
        %1522 = vmatpush1.msra.mxu0 0.0
        %1523 = vmatprep.subr.mxu0 0.0
        %1524 = vmatpush1.msra.mxu0 0.0
        %1525 = vmatprep.subr.mxu0 0.0
        %1526 = vmatpush1.msra.mxu0 0.0
        %1527 = vmatprep.subr.mxu0 0.0
        %1528 = vmatpush1.msra.mxu0 0.0
        %1529 = vmatprep.subr.mxu0 0.0
        %1530 = vmatpush1.msra.mxu0 0.0
        %1531 = vmatprep.subr.mxu0 0.0
        %1532 = vmatpush1.msra.mxu0 0.0
        %1533 = vmatprep.subr.mxu0 0.0
        %1534 = vmatpush1.msra.mxu0 0.0
        %1535 = vmatprep.subr.mxu0 0.0
        %1536 = vmatpush1.msra.mxu0 0.0
        %1537 = vmatprep.subr.mxu0 0.0
        %1538 = vmatpush1.msra.mxu0 0.0
        %1539 = vmatprep.mubr.f32.mxu0 0.0
        %1540 = vmatmul.mubr.f32.gmra.mrb[0].mxu0 %v1470
        %v1541 = vpop.f32.mrb[0].mxu0
        %v1542 = vadd.f32 0.0, %v1541
        %v1543 = vpop.f32.mrb[0].mxu0
        %1544 = vdwg.mxu0
        %1545 = vst.msk [vmem:[%s600] sm:$0x1] %vm1283, %v1463
        %v1546 = vld [vmem:[#allocation7] sm:$0xff]
        %v1547 = vld [vmem:[#allocation7 + $0x8] sm:$0xff]
        %v1548 = vld [vmem:[#allocation7 + $0x10] sm:$0xff]
        %v1549 = vld [vmem:[#allocation7 + $0x18] sm:$0xff]
        %v1550 = vld [vmem:[#allocation7 + $0x20] sm:$0xff]
        %v1551 = vld [vmem:[#allocation7 + $0x28] sm:$0xff]
        %v1552 = vld [vmem:[#allocation7 + $0x30] sm:$0xff]
        %v1553 = vld [vmem:[#allocation7 + $0x38] sm:$0xff]
        %v1554 = vld [vmem:[#allocation7 + $0x40] sm:$0xff]
        %v1555 = vld [vmem:[#allocation7 + $0x48] sm:$0xff]
        %v1556 = vld [vmem:[#allocation7 + $0x50] sm:$0xff]
        %v1557 = vld [vmem:[#allocation7 + $0x58] sm:$0xff]
        %v1558 = vld [vmem:[#allocation7 + $0x60] sm:$0xff]
        %v1559 = vld [vmem:[#allocation7 + $0x68] sm:$0xff]
        %v1560 = vld [vmem:[#allocation7 + $0x70] sm:$0xff]
        %v1561 = vld [vmem:[#allocation7 + $0x78] sm:$0xff]
        %v1562 = vld [vmem:[%s8] sm:$0x1]
        %v1564 = vlaneseq
        %v1565 = vshrl.u32 %v1564, 7
        %v1566 = vsub.s32 0, %v1565
        %v1567 = vrot.slane %v1562, %v1566
        %1569 = vmatprep.subr.mxu0 0.0
        %1570 = vmatpush1.msra.mxu0 %v1546
        %1571 = vmatprep.subr.mxu0 0.0
        %1572 = vmatpush1.msra.mxu0 %v1547
        %1573 = vmatprep.subr.mxu0 0.0
        %1574 = vmatpush1.msra.mxu0 %v1548
        %1575 = vmatprep.subr.mxu0 0.0
        %1576 = vmatpush1.msra.mxu0 %v1549
        %1577 = vmatprep.subr.mxu0 0.0
        %1578 = vmatpush1.msra.mxu0 %v1550
        %1579 = vmatprep.subr.mxu0 0.0
        %1580 = vmatpush1.msra.mxu0 %v1551
        %1581 = vmatprep.subr.mxu0 0.0
        %1582 = vmatpush1.msra.mxu0 %v1552
        %1583 = vmatprep.subr.mxu0 0.0
        %1584 = vmatpush1.msra.mxu0 %v1553
        %1585 = vmatprep.subr.mxu0 0.0
        %1586 = vmatpush1.msra.mxu0 %v1554
        %1587 = vmatprep.subr.mxu0 0.0
        %1588 = vmatpush1.msra.mxu0 %v1555
        %1589 = vmatprep.subr.mxu0 0.0
        %1590 = vmatpush1.msra.mxu0 %v1556
        %1591 = vmatprep.subr.mxu0 0.0
        %1592 = vmatpush1.msra.mxu0 %v1557
        %1593 = vmatprep.subr.mxu0 0.0
        %1594 = vmatpush1.msra.mxu0 %v1558
        %1595 = vmatprep.subr.mxu0 0.0
        %1596 = vmatpush1.msra.mxu0 %v1559
        %1597 = vmatprep.subr.mxu0 0.0
        %1598 = vmatpush1.msra.mxu0 %v1560
        %1599 = vmatprep.subr.mxu0 0.0
        %1600 = vmatpush1.msra.mxu0 %v1561
        %1601 = vmatprep.subr.mxu0 0.0
        %1602 = vmatpush1.msra.mxu0 0.0
        %1603 = vmatprep.subr.mxu0 0.0
        %1604 = vmatpush1.msra.mxu0 0.0
        %1605 = vmatprep.subr.mxu0 0.0
        %1606 = vmatpush1.msra.mxu0 0.0
        %1607 = vmatprep.subr.mxu0 0.0
        %1608 = vmatpush1.msra.mxu0 0.0
        %1609 = vmatprep.subr.mxu0 0.0
        %1610 = vmatpush1.msra.mxu0 0.0
        %1611 = vmatprep.subr.mxu0 0.0
        %1612 = vmatpush1.msra.mxu0 0.0
        %1613 = vmatprep.subr.mxu0 0.0
        %1614 = vmatpush1.msra.mxu0 0.0
        %1615 = vmatprep.subr.mxu0 0.0
        %1616 = vmatpush1.msra.mxu0 0.0
        %1617 = vmatprep.subr.mxu0 0.0
        %1618 = vmatpush1.msra.mxu0 0.0
        %1619 = vmatprep.subr.mxu0 0.0
        %1620 = vmatpush1.msra.mxu0 0.0
        %1621 = vmatprep.subr.mxu0 0.0
        %1622 = vmatpush1.msra.mxu0 0.0
        %1623 = vmatprep.subr.mxu0 0.0
        %1624 = vmatpush1.msra.mxu0 0.0
        %1625 = vmatprep.subr.mxu0 0.0
        %1626 = vmatpush1.msra.mxu0 0.0
        %1627 = vmatprep.subr.mxu0 0.0
        %1628 = vmatpush1.msra.mxu0 0.0
        %1629 = vmatprep.subr.mxu0 0.0
        %1630 = vmatpush1.msra.mxu0 0.0
        %1631 = vmatprep.subr.mxu0 0.0
        %1632 = vmatpush1.msra.mxu0 0.0
        %1633 = vmatprep.mubr.f32.mxu0 0.0
        %1634 = vmatmul.mubr.f32.gmra.mrb[0].mxu0 %v1542
        %v1635 = vpop.f32.mrb[0].mxu0
        %v1636 = vadd.f32 %v1567, %v1635
        %v1637 = vpop.f32.mrb[0].mxu0
        %1638 = vdwg.mxu0
        %v1639 = vtanh.pop %v1636
        %v1640 = vld [vmem:[%s9] sm:$0x1]
        %1641 = vmatprep.subr.mxu0 0.0
        %1642 = vmatpush1.xpose.msra.mxu0 %v1639
        %1643 = vmatprep.subr.mxu0 0.0
        %1644 = vmatpush1.xpose.msra.mxu0 0.0
        %1645 = vmatprep.subr.mxu0 0.0
        %1646 = vmatpush1.xpose.msra.mxu0 0.0
        %1647 = vmatprep.subr.mxu0 0.0
        %1648 = vmatpush1.xpose.msra.mxu0 0.0
        %1649 = vmatprep.subr.mxu0 0.0
        %1650 = vmatpush1.xpose.msra.mxu0 0.0
        %1651 = vmatprep.subr.mxu0 0.0
        %1652 = vmatpush1.xpose.msra.mxu0 0.0
        %1653 = vmatprep.subr.mxu0 0.0
        %1654 = vmatpush1.xpose.msra.mxu0 0.0
        %1655 = vmatprep.subr.mxu0 0.0
        %1656 = vmatpush1.xpose.msra.mxu0 0.0
        %1657 = vmatprep.subr.mxu0 0.0
        %1658 = vmatpush1.xpose.msra.mxu0 0.0
        %1659 = vmatprep.subr.mxu0 0.0
        %1660 = vmatpush1.xpose.msra.mxu0 0.0
        %1661 = vmatprep.subr.mxu0 0.0
        %1662 = vmatpush1.xpose.msra.mxu0 0.0
        %1663 = vmatprep.subr.mxu0 0.0
        %1664 = vmatpush1.xpose.msra.mxu0 0.0
        %1665 = vmatprep.subr.mxu0 0.0
        %1666 = vmatpush1.xpose.msra.mxu0 0.0
        %1667 = vmatprep.subr.mxu0 0.0
        %1668 = vmatpush1.xpose.msra.mxu0 0.0
        %1669 = vmatprep.subr.mxu0 0.0
        %1670 = vmatpush1.xpose.msra.mxu0 0.0
        %1671 = vmatprep.subr.mxu0 0.0
        %1672 = vmatpush1.xpose.msra.mxu0 0.0
        %1673 = vmatprep.subr.mxu0 0.0
        %1674 = vmatpush1.xpose.msra.mxu0 0.0
        %1675 = vmatprep.subr.mxu0 0.0
        %1676 = vmatpush1.xpose.msra.mxu0 0.0
        %1677 = vmatprep.subr.mxu0 0.0
        %1678 = vmatpush1.xpose.msra.mxu0 0.0
        %1679 = vmatprep.subr.mxu0 0.0
        %1680 = vmatpush1.xpose.msra.mxu0 0.0
        %1681 = vmatprep.subr.mxu0 0.0
        %1682 = vmatpush1.xpose.msra.mxu0 0.0
        %1683 = vmatprep.subr.mxu0 0.0
        %1684 = vmatpush1.xpose.msra.mxu0 0.0
        %1685 = vmatprep.subr.mxu0 0.0
        %1686 = vmatpush1.xpose.msra.mxu0 0.0
        %1687 = vmatprep.subr.mxu0 0.0
        %1688 = vmatpush1.xpose.msra.mxu0 0.0
        %1689 = vmatprep.subr.mxu0 0.0
        %1690 = vmatpush1.xpose.msra.mxu0 0.0
        %1691 = vmatprep.subr.mxu0 0.0
        %1692 = vmatpush1.xpose.msra.mxu0 0.0
        %1693 = vmatprep.subr.mxu0 0.0
        %1694 = vmatpush1.xpose.msra.mxu0 0.0
        %1695 = vmatprep.subr.mxu0 0.0
        %1696 = vmatpush1.xpose.msra.mxu0 0.0
        %1697 = vmatprep.subr.mxu0 0.0
        %1698 = vmatpush1.xpose.msra.mxu0 0.0
        %1699 = vmatprep.subr.mxu0 0.0
        %1700 = vmatpush1.xpose.msra.mxu0 0.0
        %1701 = vmatprep.subr.mxu0 0.0
        %1702 = vmatpush1.xpose.msra.mxu0 0.0
        %1703 = vmatprep.subr.mxu0 0.0
        %1704 = vmatpush1.xpose.msra.mxu0 0.0
        %1705 = vmatprep.mubr.f32.mxu0 0.0
        %1706 = vmatmul.mubr.f32.gmra.mrb[0].mxu0 %v1640
        %v1707 = vpop.f32.mrb[0].mxu0
        %v1708 = vadd.f32 0.0, %v1707
        %v1709 = vpop.f32.mrb[0].mxu0
        %1710 = vdwg.mxu0
        %vm1711 = vcmask 24576
        %v1712 = vsel %vm1711, %v1708, -inf
        %1713 = vmax.xlane.f32.xlu0 %v1712
        %v1714 = vpop.xlane.xlu0 %1713
        %v1715 = vsub.f32 %v1708, %v1714
        %v1716 = vmul.f32 %v1715, 1.442695
        %v1717 = vpow.pop %v1716
        %v1718 = vmul.u32 %v820, 2
        %vm1719 = vcmp.ge.s32.totalorder %v813, %v1718
        %v1720 = vmul.u32 %v828, 2
        %vm1721 = vcmp.lt.s32.totalorder %v813, %v1720
        %vm1722 = vmand %vm1719, %vm1721
        %v1723 = vsel %vm1722, 1, 0
        %v1724 = vcvt.s32.f32 %v1723
        %v1725 = vmul.u32 %v813, 2
        %vm1726 = vcmp.ge.s32.totalorder %v820, %v1725
        %v1727 = vmul.u32 %v858, 2
        %vm1728 = vcmp.lt.s32.totalorder %v820, %v1727
        %vm1729 = vmand %vm1726, %vm1728
        %v1730 = vsel %vm1729, 1, 0
        %v1731 = vcvt.s32.f32 %v1730
        %v1733 = vsel %vm1385, %v1717, 0
        %v1736 = vsel %vm948, %v1724, 0
        %1738 = vmatprep.subr.mxu0 0.0
        %1739 = vmatpush1.msra.mxu0 %v1736
        %1740 = vmatprep.subr.mxu0 0.0
        %1741 = vmatpush1.msra.mxu0 0.0
        %1742 = vmatprep.subr.mxu0 0.0
        %1743 = vmatpush1.msra.mxu0 0.0
        %1744 = vmatprep.subr.mxu0 0.0
        %1745 = vmatpush1.msra.mxu0 0.0
        %1746 = vmatprep.subr.mxu0 0.0
        %1747 = vmatpush1.msra.mxu0 0.0
        %1748 = vmatprep.subr.mxu0 0.0
        %1749 = vmatpush1.msra.mxu0 0.0
        %1750 = vmatprep.subr.mxu0 0.0
        %1751 = vmatpush1.msra.mxu0 0.0
        %1752 = vmatprep.subr.mxu0 0.0
        %1753 = vmatpush1.msra.mxu0 0.0
        %1754 = vmatprep.subr.mxu0 0.0
        %1755 = vmatpush1.msra.mxu0 0.0
        %1756 = vmatprep.subr.mxu0 0.0
        %1757 = vmatpush1.msra.mxu0 0.0
        %1758 = vmatprep.subr.mxu0 0.0
        %1759 = vmatpush1.msra.mxu0 0.0
        %1760 = vmatprep.subr.mxu0 0.0
        %1761 = vmatpush1.msra.mxu0 0.0
        %1762 = vmatprep.subr.mxu0 0.0
        %1763 = vmatpush1.msra.mxu0 0.0
        %1764 = vmatprep.subr.mxu0 0.0
        %1765 = vmatpush1.msra.mxu0 0.0
        %1766 = vmatprep.subr.mxu0 0.0
        %1767 = vmatpush1.msra.mxu0 0.0
        %1768 = vmatprep.subr.mxu0 0.0
        %1769 = vmatpush1.msra.mxu0 0.0
        %1770 = vmatprep.subr.mxu0 0.0
        %1771 = vmatpush1.msra.mxu0 0.0
        %1772 = vmatprep.subr.mxu0 0.0
        %1773 = vmatpush1.msra.mxu0 0.0
        %1774 = vmatprep.subr.mxu0 0.0
        %1775 = vmatpush1.msra.mxu0 0.0
        %1776 = vmatprep.subr.mxu0 0.0
        %1777 = vmatpush1.msra.mxu0 0.0
        %1778 = vmatprep.subr.mxu0 0.0
        %1779 = vmatpush1.msra.mxu0 0.0
        %1780 = vmatprep.subr.mxu0 0.0
        %1781 = vmatpush1.msra.mxu0 0.0
        %1782 = vmatprep.subr.mxu0 0.0
        %1783 = vmatpush1.msra.mxu0 0.0
        %1784 = vmatprep.subr.mxu0 0.0
        %1785 = vmatpush1.msra.mxu0 0.0
        %1786 = vmatprep.subr.mxu0 0.0
        %1787 = vmatpush1.msra.mxu0 0.0
        %1788 = vmatprep.subr.mxu0 0.0
        %1789 = vmatpush1.msra.mxu0 0.0
        %1790 = vmatprep.subr.mxu0 0.0
        %1791 = vmatpush1.msra.mxu0 0.0
        %1792 = vmatprep.subr.mxu0 0.0
        %1793 = vmatpush1.msra.mxu0 0.0
        %1794 = vmatprep.subr.mxu0 0.0
        %1795 = vmatpush1.msra.mxu0 0.0
        %1796 = vmatprep.subr.mxu0 0.0
        %1797 = vmatpush1.msra.mxu0 0.0
        %1798 = vmatprep.subr.mxu0 0.0
        %1799 = vmatpush1.msra.mxu0 0.0
        %1800 = vmatprep.subr.mxu0 0.0
        %1801 = vmatpush1.msra.mxu0 0.0
        %1802 = vmatprep.mubr.f32.mxu0 0.0
        %1803 = vmatmul.mubr.f32.gmra.mrb[0].mxu0 %v1733
        %v1804 = vpop.f32.mrb[0].mxu0
        %v1805 = vadd.f32 0.0, %v1804
        %v1806 = vpop.f32.mrb[0].mxu0
        %1807 = vdwg.mxu0
        %vm1808 = vcmask 15360
        %v1810 = vsel %vm1808, %v1805, 0
        %vm1812 = vcmask 1041408
        %v1814 = vsel %vm1812, %v1731, 0
        %1816 = vmatprep.subr.mxu0 0.0
        %1817 = vmatpush1.msra.mxu0 %v1814
        %1818 = vmatprep.subr.mxu0 0.0
        %1819 = vmatpush1.msra.mxu0 0.0
        %1820 = vmatprep.subr.mxu0 0.0
        %1821 = vmatpush1.msra.mxu0 0.0
        %1822 = vmatprep.subr.mxu0 0.0
        %1823 = vmatpush1.msra.mxu0 0.0
        %1824 = vmatprep.subr.mxu0 0.0
        %1825 = vmatpush1.msra.mxu0 0.0
        %1826 = vmatprep.subr.mxu0 0.0
        %1827 = vmatpush1.msra.mxu0 0.0
        %1828 = vmatprep.subr.mxu0 0.0
        %1829 = vmatpush1.msra.mxu0 0.0
        %1830 = vmatprep.subr.mxu0 0.0
        %1831 = vmatpush1.msra.mxu0 0.0
        %1832 = vmatprep.subr.mxu0 0.0
        %1833 = vmatpush1.msra.mxu0 0.0
        %1834 = vmatprep.subr.mxu0 0.0
        %1835 = vmatpush1.msra.mxu0 0.0
        %1836 = vmatprep.subr.mxu0 0.0
        %1837 = vmatpush1.msra.mxu0 0.0
        %1838 = vmatprep.subr.mxu0 0.0
        %1839 = vmatpush1.msra.mxu0 0.0
        %1840 = vmatprep.subr.mxu0 0.0
        %1841 = vmatpush1.msra.mxu0 0.0
        %1842 = vmatprep.subr.mxu0 0.0
        %1843 = vmatpush1.msra.mxu0 0.0
        %1844 = vmatprep.subr.mxu0 0.0
        %1845 = vmatpush1.msra.mxu0 0.0
        %1846 = vmatprep.subr.mxu0 0.0
        %1847 = vmatpush1.msra.mxu0 0.0
        %1848 = vmatprep.subr.mxu0 0.0
        %1849 = vmatpush1.msra.mxu0 0.0
        %1850 = vmatprep.subr.mxu0 0.0
        %1851 = vmatpush1.msra.mxu0 0.0
        %1852 = vmatprep.subr.mxu0 0.0
        %1853 = vmatpush1.msra.mxu0 0.0
        %1854 = vmatprep.subr.mxu0 0.0
        %1855 = vmatpush1.msra.mxu0 0.0
        %1856 = vmatprep.subr.mxu0 0.0
        %1857 = vmatpush1.msra.mxu0 0.0
        %1858 = vmatprep.subr.mxu0 0.0
        %1859 = vmatpush1.msra.mxu0 0.0
        %1860 = vmatprep.subr.mxu0 0.0
        %1861 = vmatpush1.msra.mxu0 0.0
        %1862 = vmatprep.subr.mxu0 0.0
        %1863 = vmatpush1.msra.mxu0 0.0
        %1864 = vmatprep.subr.mxu0 0.0
        %1865 = vmatpush1.msra.mxu0 0.0
        %1866 = vmatprep.subr.mxu0 0.0
        %1867 = vmatpush1.msra.mxu0 0.0
        %1868 = vmatprep.subr.mxu0 0.0
        %1869 = vmatpush1.msra.mxu0 0.0
        %1870 = vmatprep.subr.mxu0 0.0
        %1871 = vmatpush1.msra.mxu0 0.0
        %1872 = vmatprep.subr.mxu0 0.0
        %1873 = vmatpush1.msra.mxu0 0.0
        %1874 = vmatprep.subr.mxu0 0.0
        %1875 = vmatpush1.msra.mxu0 0.0
        %1876 = vmatprep.subr.mxu0 0.0
        %1877 = vmatpush1.msra.mxu0 0.0
        %1878 = vmatprep.subr.mxu0 0.0
        %1879 = vmatpush1.msra.mxu0 0.0
        %1880 = vmatprep.mubr.f32.mxu0 0.0
        %1881 = vmatmul.mubr.f32.gmra.mrb[0].mxu0 %v1810
        %v1882 = vpop.f32.mrb[0].mxu0
        %v1883 = vadd.f32 0.0, %v1882
        %v1884 = vpop.f32.mrb[0].mxu0
        %1885 = vdwg.mxu0
        %v1886 = vrcp.pop %v1883
        %v1887 = vmul.f32 %v1717, %v1886
        %v1888 = vlaneseq
        %v1889 = vshrl.u32 %v1888, 7
        %v1890 = vsub.s32 0, %v1889
        %v1891 = vrot.slane %v1887, %v1890
        %v1892 = vmul.f32 %v1731, %v1891
        %v1894 = vsel %vm1385, %v1892, 0
        %v1897 = vsel %vm948, %v1542, 0
        %1899 = vmatprep.subr.mxu0 0.0
        %1900 = vmatpush1.msra.mxu0 %v1897
        %1901 = vmatprep.subr.mxu0 0.0
        %1902 = vmatpush1.msra.mxu0 0.0
        %1903 = vmatprep.subr.mxu0 0.0
        %1904 = vmatpush1.msra.mxu0 0.0
        %1905 = vmatprep.subr.mxu0 0.0
        %1906 = vmatpush1.msra.mxu0 0.0
        %1907 = vmatprep.subr.mxu0 0.0
        %1908 = vmatpush1.msra.mxu0 0.0
        %1909 = vmatprep.subr.mxu0 0.0
        %1910 = vmatpush1.msra.mxu0 0.0
        %1911 = vmatprep.subr.mxu0 0.0
        %1912 = vmatpush1.msra.mxu0 0.0
        %1913 = vmatprep.subr.mxu0 0.0
        %1914 = vmatpush1.msra.mxu0 0.0
        %1915 = vmatprep.subr.mxu0 0.0
        %1916 = vmatpush1.msra.mxu0 0.0
        %1917 = vmatprep.subr.mxu0 0.0
        %1918 = vmatpush1.msra.mxu0 0.0
        %1919 = vmatprep.subr.mxu0 0.0
        %1920 = vmatpush1.msra.mxu0 0.0
        %1921 = vmatprep.subr.mxu0 0.0
        %1922 = vmatpush1.msra.mxu0 0.0
        %1923 = vmatprep.subr.mxu0 0.0
        %1924 = vmatpush1.msra.mxu0 0.0
        %1925 = vmatprep.subr.mxu0 0.0
        %1926 = vmatpush1.msra.mxu0 0.0
        %1927 = vmatprep.subr.mxu0 0.0
        %1928 = vmatpush1.msra.mxu0 0.0
        %1929 = vmatprep.subr.mxu0 0.0
        %1930 = vmatpush1.msra.mxu0 0.0
        %1931 = vmatprep.subr.mxu0 0.0
        %1932 = vmatpush1.msra.mxu0 0.0
        %1933 = vmatprep.subr.mxu0 0.0
        %1934 = vmatpush1.msra.mxu0 0.0
        %1935 = vmatprep.subr.mxu0 0.0
        %1936 = vmatpush1.msra.mxu0 0.0
        %1937 = vmatprep.subr.mxu0 0.0
        %1938 = vmatpush1.msra.mxu0 0.0
        %1939 = vmatprep.subr.mxu0 0.0
        %1940 = vmatpush1.msra.mxu0 0.0
        %1941 = vmatprep.subr.mxu0 0.0
        %1942 = vmatpush1.msra.mxu0 0.0
        %1943 = vmatprep.subr.mxu0 0.0
        %1944 = vmatpush1.msra.mxu0 0.0
        %1945 = vmatprep.subr.mxu0 0.0
        %1946 = vmatpush1.msra.mxu0 0.0
        %1947 = vmatprep.subr.mxu0 0.0
        %1948 = vmatpush1.msra.mxu0 0.0
        %1949 = vmatprep.subr.mxu0 0.0
        %1950 = vmatpush1.msra.mxu0 0.0
        %1951 = vmatprep.subr.mxu0 0.0
        %1952 = vmatpush1.msra.mxu0 0.0
        %1953 = vmatprep.subr.mxu0 0.0
        %1954 = vmatpush1.msra.mxu0 0.0
        %1955 = vmatprep.subr.mxu0 0.0
        %1956 = vmatpush1.msra.mxu0 0.0
        %1957 = vmatprep.subr.mxu0 0.0
        %1958 = vmatpush1.msra.mxu0 0.0
        %1959 = vmatprep.subr.mxu0 0.0
        %1960 = vmatpush1.msra.mxu0 0.0
        %1961 = vmatprep.subr.mxu0 0.0
        %1962 = vmatpush1.msra.mxu0 0.0
        %1963 = vmatprep.mubr.f32.mxu0 0.0
        %1964 = vmatmul.mubr.f32.gmra.mrb[0].mxu0 %v1894
        %v1965 = vpop.f32.mrb[0].mxu0
        %v1966 = vadd.f32 0.0, %v1965
        %v1967 = vpop.f32.mrb[0].mxu0
        %1968 = vdwg.mxu0
        %1969 = vst.msk [vmem:[%s603] sm:$0x1] %vm1711, %v1887
        %v1970 = vld [vmem:[%s10] sm:$0xff]
        %v1971 = vld [vmem:[%s10 + $0x8] sm:$0xff]
        %v1972 = vld [vmem:[%s10 + $0x10] sm:$0xff]
        %v1973 = vld [vmem:[%s10 + $0x18] sm:$0xff]
        %v1974 = vld [vmem:[%s10 + $0x20] sm:$0xff]
        %v1975 = vld [vmem:[%s10 + $0x28] sm:$0xff]
        %v1976 = vld [vmem:[%s10 + $0x30] sm:$0xff]
        %v1977 = vld [vmem:[%s10 + $0x38] sm:$0xff]
        %v1978 = vld [vmem:[%s10 + $0x40] sm:$0xff]
        %v1979 = vld [vmem:[%s10 + $0x48] sm:$0xff]
        %v1980 = vld [vmem:[%s10 + $0x50] sm:$0xff]
        %v1981 = vld [vmem:[%s10 + $0x58] sm:$0xff]
        %v1982 = vld [vmem:[%s10 + $0x60] sm:$0xff]
        %v1983 = vld [vmem:[%s10 + $0x68] sm:$0xff]
        %v1984 = vld [vmem:[%s10 + $0x70] sm:$0xff]
        %v1985 = vld [vmem:[%s10 + $0x78] sm:$0xff]
        %v1986 = vld [vmem:[%s11] sm:$0x1]
        %v1988 = vlaneseq
        %v1989 = vshrl.u32 %v1988, 7
        %v1990 = vsub.s32 0, %v1989
        %v1991 = vrot.slane %v1986, %v1990
        %1993 = vmatprep.subr.mxu0 0.0
        %1994 = vmatpush1.msra.mxu0 %v1970
        %1995 = vmatprep.subr.mxu0 0.0
        %1996 = vmatpush1.msra.mxu0 %v1971
        %1997 = vmatprep.subr.mxu0 0.0
        %1998 = vmatpush1.msra.mxu0 %v1972
        %1999 = vmatprep.subr.mxu0 0.0
        %2000 = vmatpush1.msra.mxu0 %v1973
        %2001 = vmatprep.subr.mxu0 0.0
        %2002 = vmatpush1.msra.mxu0 %v1974
        %2003 = vmatprep.subr.mxu0 0.0
        %2004 = vmatpush1.msra.mxu0 %v1975
        %2005 = vmatprep.subr.mxu0 0.0
        %2006 = vmatpush1.msra.mxu0 %v1976
        %2007 = vmatprep.subr.mxu0 0.0
        %2008 = vmatpush1.msra.mxu0 %v1977
        %2009 = vmatprep.subr.mxu0 0.0
        %2010 = vmatpush1.msra.mxu0 %v1978
        %2011 = vmatprep.subr.mxu0 0.0
        %2012 = vmatpush1.msra.mxu0 %v1979
        %2013 = vmatprep.subr.mxu0 0.0
        %2014 = vmatpush1.msra.mxu0 %v1980
        %2015 = vmatprep.subr.mxu0 0.0
        %2016 = vmatpush1.msra.mxu0 %v1981
        %2017 = vmatprep.subr.mxu0 0.0
        %2018 = vmatpush1.msra.mxu0 %v1982
        %2019 = vmatprep.subr.mxu0 0.0
        %2020 = vmatpush1.msra.mxu0 %v1983
        %2021 = vmatprep.subr.mxu0 0.0
        %2022 = vmatpush1.msra.mxu0 %v1984
        %2023 = vmatprep.subr.mxu0 0.0
        %2024 = vmatpush1.msra.mxu0 %v1985
        %2025 = vmatprep.subr.mxu0 0.0
        %2026 = vmatpush1.msra.mxu0 0.0
        %2027 = vmatprep.subr.mxu0 0.0
        %2028 = vmatpush1.msra.mxu0 0.0
        %2029 = vmatprep.subr.mxu0 0.0
        %2030 = vmatpush1.msra.mxu0 0.0
        %2031 = vmatprep.subr.mxu0 0.0
        %2032 = vmatpush1.msra.mxu0 0.0
        %2033 = vmatprep.subr.mxu0 0.0
        %2034 = vmatpush1.msra.mxu0 0.0
        %2035 = vmatprep.subr.mxu0 0.0
        %2036 = vmatpush1.msra.mxu0 0.0
        %2037 = vmatprep.subr.mxu0 0.0
        %2038 = vmatpush1.msra.mxu0 0.0
        %2039 = vmatprep.subr.mxu0 0.0
        %2040 = vmatpush1.msra.mxu0 0.0
        %2041 = vmatprep.subr.mxu0 0.0
        %2042 = vmatpush1.msra.mxu0 0.0
        %2043 = vmatprep.subr.mxu0 0.0
        %2044 = vmatpush1.msra.mxu0 0.0
        %2045 = vmatprep.subr.mxu0 0.0
        %2046 = vmatpush1.msra.mxu0 0.0
        %2047 = vmatprep.subr.mxu0 0.0
        %2048 = vmatpush1.msra.mxu0 0.0
        %2049 = vmatprep.subr.mxu0 0.0
        %2050 = vmatpush1.msra.mxu0 0.0
        %2051 = vmatprep.subr.mxu0 0.0
        %2052 = vmatpush1.msra.mxu0 0.0
        %2053 = vmatprep.subr.mxu0 0.0
        %2054 = vmatpush1.msra.mxu0 0.0
        %2055 = vmatprep.subr.mxu0 0.0
        %2056 = vmatpush1.msra.mxu0 0.0
        %2057 = vmatprep.mubr.f32.mxu0 0.0
        %2058 = vmatmul.mubr.f32.gmra.mrb[0].mxu0 %v1966
        %v2059 = vpop.f32.mrb[0].mxu0
        %v2060 = vadd.f32 %v1991, %v2059
        %v2061 = vpop.f32.mrb[0].mxu0
        %2062 = vdwg.mxu0
        %vm2063 = vcmask 58368
        %2064 = vst.msk [vmem:[%s579] sm:$0x3] %vm2063, %v2060
        %v2065 = vsel %vm2063, %v2060, -inf
        %2066 = vmax.xlane.f32.xlu0 %v2065
        %v2067 = vpop.xlane.xlu0 %2066
        %v2068 = vsub.f32 %v2060, %v2067
        %v2069 = vmul.f32 %v2068, 1.442695
        %v2070 = vpow.pop %v2069
        %v2071 = vsel %vm2063, %v2070, 0.0
        %2072 = vadd.xlane.f32.xlu0 %v2071
        %v2073 = vpop.xlane.xlu0 %2072
        %v2074 = vrcp.pop %v2073
        %v2075 = vmul.f32 %v2070, %v2074
        %2076 = vst.msk [vmem:[%s572] sm:$0x3] %vm2063, %v2075
        %s2077 = sand.u32 %s303, 1
        %s2078 = scalar_lea.sflag [#allocation4], %s2077
        %s2079 = sand.u32 %s303, 1
        %s2080 = smul.addr %s2079, 2
        %s2081 = scalar_lea.vmem [#allocation8], %s2080
        %s2082 = sand.u32 %s329, 1
        %s2083 = scalar_lea.sflag [#allocation10], %s2082
        %s2084 = sand.u32 %s329, 1
        %s2085 = smul.addr %s2084, 2
        %s2086 = scalar_lea.vmem [#allocation9], %s2085
        %p2087 = scmp.lt.s32.totalorder %s38, 1
        %s2088 = scalar_select %p2087, %s38, 1
        %s2089 = scalar_lea.vmem %s14, %s2088
        %p2090 = scmp.lt.s32.totalorder %s38, 1
        %s2091 = scalar_select %p2090, %s38, 1
        %s2092 = scalar_lea.vmem %s15, %s2091
        %p2093 = scmp.lt.s32.totalorder %s38, 1
        %s2094 = scalar_select %p2093, %s38, 1
        %s2095 = scalar_lea.vmem %s16, %s2094
        // Predicated region
        $region81: #{hierarchy_model_forward.1} parent=67 // pred_check
          %p2096 = pneg %p313
        $region82: #{hierarchy_model_forward.1} parent=67 // pred_check_branch
          %2098 = sbr.rel (%p2096) target = $region84
        $region83: #{hierarchy_model_forward.1} parent=67 // pred_region
          %s2100 = ssub.s32 32, 32
          %2101 = vsyncadd %s2078, %s2100
          %s2102 = smul.addr %s38, 32
          %s2103 = scalar_lea.hbm %s12, %s2102
          %s2105 = sshll.u32 %s2081, 4
          %s2106 = int_to_ptr.vmem [resolvable:$true] %s2105
          %2108 = dma.vmem_to_hbm [thread:$0]  %s2106, 32, %s2103, %s2078
        $region84: #{hierarchy_model_forward.1} parent=67 // pred_fallthru
          _
        // Predicated region
        $region85: #{hierarchy_model_forward.1} parent=67 // pred_check
          %p2109 = pneg %p339
        $region86: #{hierarchy_model_forward.1} parent=67 // pred_check_branch
          %2111 = sbr.rel (%p2109) target = $region88
        $region87: #{hierarchy_model_forward.1} parent=67 // pred_region
          %s2113 = ssub.s32 32, 32
          %2114 = vsyncadd %s2083, %s2113
          %s2115 = smul.addr %s38, 32
          %s2116 = scalar_lea.hbm %s13, %s2115
          %s2118 = sshll.u32 %s2086, 4
          %s2119 = int_to_ptr.vmem [resolvable:$true] %s2118
          %2121 = dma.vmem_to_hbm [thread:$0]  %s2119, 32, %s2116, %s2083
        $region88: #{hierarchy_model_forward.1} parent=67 // pred_fallthru
          _
        // Predicated region
        $region89: #{hierarchy_model_forward.1} parent=67 // pred_check
          %p2122 = pneg %p365
        $region90: #{hierarchy_model_forward.1} parent=67 // pred_check_branch
          %2124 = sbr.rel (%p2122) target = $region92
        $region91: #{hierarchy_model_forward.1} parent=67 // pred_region
          _
        $region92: #{hierarchy_model_forward.1} parent=67 // pred_fallthru
          _
        // Predicated region
        $region93: #{hierarchy_model_forward.1} parent=67 // pred_check
          %p2125 = pneg %p391
        $region94: #{hierarchy_model_forward.1} parent=67 // pred_check_branch
          %2127 = sbr.rel (%p2125) target = $region96
        $region95: #{hierarchy_model_forward.1} parent=67 // pred_region
          _
        $region96: #{hierarchy_model_forward.1} parent=67 // pred_fallthru
          _
        // Predicated region
        $region97: #{hierarchy_model_forward.1} parent=67 // pred_check
          %p2128 = pneg %p417
        $region98: #{hierarchy_model_forward.1} parent=67 // pred_check_branch
          %2130 = sbr.rel (%p2128) target = $region100
        $region99: #{hierarchy_model_forward.1} parent=67 // pred_region
          _
        $region100: #{hierarchy_model_forward.1} parent=67 // pred_fallthru
          _
      $region68: #{hierarchy_model_forward.1} parent=5 // pred_fallthru
        _
      %p2131 = scmp.le.s32.totalorder 2, %s33
      // Predicated region
      $region101: #{hierarchy_model_forward.1} parent=5 // pred_check
        %p2132 = pneg %p2131
      $region102: #{hierarchy_model_forward.1} parent=5 // pred_check_branch
        %2134 = sbr.rel (%p2132) target = $region104
      $region103: #{hierarchy_model_forward.1} parent=5 // pred_region
        %s2135 = ssub.s32 %s33, 2
        // Predicated region
        $region105: #{hierarchy_model_forward.1} parent=103 // pred_check
          %p2136 = pneg %p319
        $region106: #{hierarchy_model_forward.1} parent=103 // pred_check_branch
          %2138 = sbr.rel (%p2136) target = $region108
        $region107: #{hierarchy_model_forward.1} parent=103 // pred_region
          %s2139 = sand.u32 %s304, 1
          %s2140 = scalar_lea.sflag [#allocation4], %s2139
          %s2141 = sand.u32 %s304, 1
          %s2142 = smul.addr %s2141, 2
          %s2143 = scalar_lea.vmem [#allocation8], %s2142
          %2144 = dma.done %s2140, 32
        $region108: #{hierarchy_model_forward.1} parent=103 // pred_fallthru
          _
        // Predicated region
        $region109: #{hierarchy_model_forward.1} parent=103 // pred_check
          %p2145 = pneg %p345
        $region110: #{hierarchy_model_forward.1} parent=103 // pred_check_branch
          %2147 = sbr.rel (%p2145) target = $region112
        $region111: #{hierarchy_model_forward.1} parent=103 // pred_region
          %s2148 = sand.u32 %s330, 1
          %s2149 = scalar_lea.sflag [#allocation10], %s2148
          %s2150 = sand.u32 %s330, 1
          %s2151 = smul.addr %s2150, 2
          %s2152 = scalar_lea.vmem [#allocation9], %s2151
          %2153 = dma.done %s2149, 32
        $region112: #{hierarchy_model_forward.1} parent=103 // pred_fallthru
          _
        // Predicated region
        $region113: #{hierarchy_model_forward.1} parent=103 // pred_check
          %p2154 = pneg %p371
        $region114: #{hierarchy_model_forward.1} parent=103 // pred_check_branch
          %2156 = sbr.rel (%p2154) target = $region116
        $region115: #{hierarchy_model_forward.1} parent=103 // pred_region
          %p2157 = scmp.lt.s32.totalorder %s39, 1
          %s2158 = scalar_select %p2157, %s39, 1
          %s2159 = scalar_lea.vmem %s14, %s2158
        $region116: #{hierarchy_model_forward.1} parent=103 // pred_fallthru
          _
        // Predicated region
        $region117: #{hierarchy_model_forward.1} parent=103 // pred_check
          %p2160 = pneg %p397
        $region118: #{hierarchy_model_forward.1} parent=103 // pred_check_branch
          %2162 = sbr.rel (%p2160) target = $region120
        $region119: #{hierarchy_model_forward.1} parent=103 // pred_region
          %p2163 = scmp.lt.s32.totalorder %s39, 1
          %s2164 = scalar_select %p2163, %s39, 1
          %s2165 = scalar_lea.vmem %s15, %s2164
        $region120: #{hierarchy_model_forward.1} parent=103 // pred_fallthru
          _
        // Predicated region
        $region121: #{hierarchy_model_forward.1} parent=103 // pred_check
          %p2166 = pneg %p423
        $region122: #{hierarchy_model_forward.1} parent=103 // pred_check_branch
          %2168 = sbr.rel (%p2166) target = $region124
        $region123: #{hierarchy_model_forward.1} parent=103 // pred_region
          %p2169 = scmp.lt.s32.totalorder %s39, 1
          %s2170 = scalar_select %p2169, %s39, 1
          %s2171 = scalar_lea.vmem %s16, %s2170
        $region124: #{hierarchy_model_forward.1} parent=103 // pred_fallthru
          _
      $region104: #{hierarchy_model_forward.1} parent=5 // pred_fallthru
        _
    $region6: #{hierarchy_model_forward.1} parent=1 // loop_footer
      %s37 = sadd.s32 1, %s33
    $region7: #{hierarchy_model_forward.1} parent=1 // loop_footer_branch
      %32 = sbr.rel target = $region3
    $region8: #{hierarchy_model_forward.1} parent=1 // loop_exit
      _
    %2172 = vsyncpa [#allocation3], 1
    %s2173 = scalar_lea.sflag [#allocation3], 1
    %2174 = vsyncpa %s2173, 1
    %2175 = vsyncpa [#allocation6], 1
    %2176 = vsyncpa [#allocation4], 1
    %s2177 = scalar_lea.sflag [#allocation4], 1
    %2178 = vsyncpa %s2177, 1
    %2179 = vsyncpa [#allocation10], 1
    %s2180 = scalar_lea.sflag [#allocation10], 1
    %2181 = vsyncpa %s2180, 1

</llo_original>
